<compile_context>
chip_gen: v6e
topology: v6e:2x2x1
jax: 0.10.0
libtpu: 0.0.40
codegen_flags: <defaults>
</compile_context>

<pallas_src>
import jax
import jax.numpy as jnp
import numpy as np
from jax.experimental import pallas as pl
from jax.experimental.pallas import tpu as pltpu

LN_EPS = 1e-5  # torch.nn.LayerNorm default eps


# ----------------------------- kernel -----------------------------

def _make_pure_mlp_kernel(num_hidden, hidden_dims, Dp):
    assert num_hidden >= 1, "wrapper assumes net has at least one hidden layer"

    def kernel(states_ref, advs_ref, w0s_ref, wslab_ref, vslab_ref, out_ref):
        f32 = jnp.float32

        def vrow(r):                               # [1, Dp] row of the vector slab
            return vslab_ref[pl.ds(r, 1), :]

        # Lane masks for LayerNorm stats over the true (unpadded) width; built
        # once per distinct width at trace time.
        masks = {}
        if any(d < Dp for d in hidden_dims):
            lane = jax.lax.broadcasted_iota(jnp.int32, (1, Dp), 1)
            for d in sorted(set(hidden_dims)):
                if d < Dp:
                    masks[d] = lane < d

        def layernorm(h, gamma, beta, d):
            inv_d = np.float32(1.0 / d)
            mu = jnp.sum(h, axis=-1, keepdims=True) * inv_d
            xc = h - mu
            if d < Dp:
                xc = jnp.where(masks[d], xc, 0.0)   # exclude padded lanes from stats
            var = jnp.sum(xc * xc, axis=-1, keepdims=True) * inv_d
            return xc * jax.lax.rsqrt(var + LN_EPS) * gamma + beta

        states = states_ref[...]                    # [tb, sd]  f32
        adv = advs_ref[...]                         # [tb, 1]   f32

        # ---- layer 0: adv_net + concat folded into the first Linear ----
        h = jnp.dot(states, w0s_ref[...], preferred_element_type=f32)
        h = h + adv * vrow(0) + vrow(1)             # adv_fold_w, adv_fold_b (incl. b0)
        h = layernorm(h, vrow(2), vrow(3), hidden_dims[0])
        h = jnp.maximum(h, 0.0)
        # (dropout: identity in eval mode)

        # ---- remaining hidden layers ----
        row = 4
        for j in range(1, num_hidden):
            h = jnp.dot(h, wslab_ref[j - 1], preferred_element_type=f32) + vrow(row)
            h = layernorm(h, vrow(row + 1), vrow(row + 2), hidden_dims[j])
            h = jnp.maximum(h, 0.0)
            row += 3

        # ---- final Linear (no norm / activation); padded cols are exactly 0 ----
        out = jnp.dot(h, wslab_ref[num_hidden - 1], preferred_element_type=f32) + vrow(row)
        out_ref[...] = out.astype(out_ref.dtype)

    return kernel


# ----------------------------- one-time param prep -----------------------------

def prepare_pure_mlp_params(params, state_dim):
    """Fold adv_net into the first Linear and pack everything into 3 arrays."""
    f32 = jnp.float32
    hidden_dims = [int(g.shape[-1]) for g in params["ln_gs"]]
    nh = len(hidden_dims)
    assert nh >= 1
    action_dim = int(params["net_Ws"][-1].shape[1])
    max_d = max(hidden_dims + [action_dim])
    Dp = ((max_d + 127) // 128) * 128               # common lane-dense width

    W0 = jnp.asarray(params["net_Ws"][0], f32)      # [sd + E, h0]
    W0s = W0[:state_dim]                            # [sd, h0]
    W0e = W0[state_dim:]                            # [E,  h0]
    adv_fold_w = jnp.asarray(params["adv_W"], f32) @ W0e                        # [1, h0]
    adv_fold_b = jnp.asarray(params["adv_b"], f32) @ W0e \
        + jnp.asarray(params["net_bs"][0], f32)                                 # [1, h0]

    def padv(v):                                    # [1, d] -> [Dp]
        v = jnp.asarray(v, f32).reshape(-1)
        return jnp.pad(v, (0, Dp - v.shape[0]))

    def padw(w):                                    # [din, dout] -> [Dp, Dp]
        w = jnp.asarray(w, f32)
        return jnp.pad(w, ((0, Dp - w.shape[0]), (0, Dp - w.shape[1])))

    vec_rows = [padv(adv_fold_w), padv(adv_fold_b),
                padv(params["ln_gs"][0]), padv(params["ln_Bs"][0])]
    mats = []
    for j in range(1, nh):
        vec_rows += [padv(params["net_bs"][j]),
                     padv(params["ln_gs"][j]), padv(params["ln_Bs"][j])]
        mats.append(padw(params["net_Ws"][j]))
    vec_rows.append(padv(params["net_bs"][-1]))
    mats.append(padw(params["net_Ws"][-1]))

    return dict(
        w0s=jnp.pad(W0s, ((0, 0), (0, Dp - W0s.shape[1]))),   # [sd, Dp]
        wslab=jnp.stack(mats),                                 # [nh, Dp, Dp]
        vslab=jnp.stack(vec_rows),                             # [3*nh+2, Dp]
        hidden_dims=tuple(hidden_dims), action_dim=action_dim,
        state_dim=int(state_dim), Dp=int(Dp),
    )


# ----------------------------- wrapper -----------------------------

def _pick_tb(B):
    """Per-generation batch tile: 1 grid step on single-TC chips (v5e/v6e), an
    even >=2-step 'parallel' grid on dual-TC v7x; tile capped at 512 rows."""
    try:
        kind = jax.devices()[0].device_kind.lower()
    except Exception:
        kind = ""
    steps = 2 if ("v7" in kind and B % 2 == 0 and (B // 2) % 8 == 0) else 1
    tb = B // steps
    while tb > 512 and tb % 16 == 0:
        tb //= 2
    return tb


def pure_mlp(states, agent_advs, prep, *, tb=None):
    B, sd = states.shape
    assert sd == prep["state_dim"]
    hidden_dims = prep["hidden_dims"]
    nh = len(hidden_dims)
    action_dim = prep["action_dim"]
    Dp = prep["Dp"]

    tb = _pick_tb(B) if tb is None else min(tb, B)
    assert B % tb == 0, (B, tb)
    assert tb % 8 == 0 or tb == B

    w0s, wslab, vslab = prep["w0s"], prep["wslab"], prep["vslab"]

    def const_spec(shape):
        # Grid-invariant block: stays resident in VMEM, not re-DMA'd per step.
        return pl.BlockSpec(shape, lambda i, _n=len(shape): (0,) * _n)

    # Advisory cost estimate so XLA can overlap this tiny kernel with neighbours.
    flops = 2 * B * sd * Dp + 2 * B * Dp * Dp * nh + 10 * B * Dp * nh
    bytes_accessed = (states.size * 4 + agent_advs.size * 4 + B * Dp * 4
                      + int(w0s.size + wslab.size + vslab.size) * 4)
    cost = pl.CostEstimate(flops=int(flops), transcendentals=int(B * nh),
                           bytes_accessed=int(bytes_accessed))

    out_pad = pl.pallas_call(
        _make_pure_mlp_kernel(nh, hidden_dims, Dp),
        out_shape=jax.ShapeDtypeStruct((B, Dp), jnp.float32),
        grid_spec=pltpu.PrefetchScalarGridSpec(
            num_scalar_prefetch=0,
            grid=(B // tb,),
            in_specs=[
                pl.BlockSpec((tb, sd), lambda i: (i, 0)),
                pl.BlockSpec((tb, 1), lambda i: (i, 0)),
                const_spec(w0s.shape),
                const_spec(wslab.shape),
                const_spec(vslab.shape),
            ],
            # Lane-dense (Dp is a multiple of 128) -> unmasked vst, full bursts.
            out_specs=pl.BlockSpec((tb, Dp), lambda i: (i, 0)),
        ),
        compiler_params=pltpu.CompilerParams(
            dimension_semantics=("parallel",),
        ),
        cost_estimate=cost,
    )(states, agent_advs, w0s, wslab, vslab)

    return out_pad[:, :action_dim]


# ----------------------------- test scaffolding -----------------------------

def init_params(key, state_dim, expanded_dim, action_dim, hidden_dims):
    ks = iter(jax.random.split(key, 4 * (len(hidden_dims) + 3)))

    def lin(din, dout):
        w = jax.random.normal(next(ks), (din, dout), jnp.float32) / np.sqrt(din)
        b = jax.random.normal(next(ks), (1, dout), jnp.float32) * 0.01
        return w, b

    p = {"net_Ws": [], "net_bs": [], "ln_gs": [], "ln_Bs": []}
    p["adv_W"], p["adv_b"] = lin(1, expanded_dim)
    dims = [state_dim + expanded_dim] + list(hidden_dims) + [action_dim]
    for j, (din, dout) in enumerate(zip(dims[:-1], dims[1:])):
        w, b = lin(din, dout)
        p["net_Ws"].append(w)
        p["net_bs"].append(b)
        if j < len(hidden_dims):
            p["ln_gs"].append(1.0 + 0.1 * jax.random.normal(next(ks), (1, dout), jnp.float32))
            p["ln_Bs"].append(0.01 * jax.random.normal(next(ks), (1, dout), jnp.float32))
    return p


def _ln_ref(x, g, b):
    mu = jnp.mean(x, -1, keepdims=True)
    var = jnp.mean((x - mu) ** 2, -1, keepdims=True)
    return (x - mu) * jax.lax.rsqrt(var + LN_EPS) * g + b


def reference_f32(states, advs, p):
    # Exact eval-mode PureMLP semantics, all f32.
    x = jnp.concatenate([states, advs @ p["adv_W"] + p["adv_b"]], axis=-1)
    nh = len(p["ln_gs"])
    for j in range(nh):
        x = x @ p["net_Ws"][j] + p["net_bs"][j]
        x = jnp.maximum(_ln_ref(x, p["ln_gs"][j], p["ln_Bs"][j]), 0.0)
    return x @ p["net_Ws"][-1] + p["net_bs"][-1]


if __name__ == "__main__":
    B = 256
    STATE_DIM = 32
    EXPANDED_DIM = 32
    HIDDEN_DIMS = [64, 64]
    ACTION_DIM = 16

    key = jax.random.PRNGKey(0)
    k_s, k_a, k_p = jax.random.split(key, 3)
    states = jax.random.normal(k_s, (B, STATE_DIM), jnp.float32)
    agent_advs = jax.random.normal(k_a, (B, 1), jnp.float32)
    params = init_params(k_p, STATE_DIM, EXPANDED_DIM, ACTION_DIM, HIDDEN_DIMS)

    # One-time parameter preparation (fold adv_net into layer 0, pack slabs).
    prep = prepare_pure_mlp_params(params, STATE_DIM)

    fwd = jax.jit(lambda s, a: pure_mlp(s, a, prep))
    out = jax.block_until_ready(fwd(states, agent_advs))
    assert out.shape == (B, ACTION_DIM)

    ref = np.asarray(reference_f32(states, agent_advs, params))
    err = float(np.max(np.abs(np.asarray(out) - ref)))
    assert np.allclose(np.asarray(out), ref, atol=2e-3, rtol=2e-3), err

    print("KERNEL_OK")
</pallas_src>

<mosaic_0001>
module attributes {stable_mosaic.version = 11 : i64} {
  func.func @kernel(%arg0: i32, %arg1: memref<256x32xf32, #tpu.memory_space<vmem>>, %arg2: memref<256x1xf32, #tpu.memory_space<vmem>>, %arg3: memref<32x128xf32, #tpu.memory_space<vmem>>, %arg4: memref<2x128x128xf32, #tpu.memory_space<vmem>>, %arg5: memref<8x128xf32, #tpu.memory_space<vmem>>, %arg6: memref<256x128xf32, #tpu.memory_space<vmem>>) attributes {dimension_semantics = [#tpu.dimension_semantics<parallel>], iteration_bounds = array<i64: 1>, scalar_prefetch = 0 : i64, scratch_operands = 0 : i64, tpu.core_type = #tpu.core_type<tc>, window_params = [{transform_indices = @transform_0, window_bounds = array<i64: 256, 32>}, {transform_indices = @transform_1, window_bounds = array<i64: 256, 1>}, {pipeline_mode = #tpu.pipeline_mode<synchronous>, transform_indices = @transform_2, window_bounds = array<i64: 32, 128>}, {pipeline_mode = #tpu.pipeline_mode<synchronous>, transform_indices = @transform_3, window_bounds = array<i64: 2, 128, 128>}, {pipeline_mode = #tpu.pipeline_mode<synchronous>, transform_indices = @transform_4, window_bounds = array<i64: 8, 128>}, {transform_indices = @transform_5, window_bounds = array<i64: 256, 128>}]} {
    %0 = tpu.iota {dimensions = array<i32: 1>} : vector<1x128xi32>
    %c64_i32 = arith.constant 64 : i32
    %1 = vector.broadcast %c64_i32 : i32 to vector<1x128xi32>
    %2 = arith.cmpi slt, %0, %1 : vector<1x128xi32>
    %c0 = arith.constant 0 : index
    %c0_0 = arith.constant 0 : index
    %3 = vector.load %arg1[%c0, %c0_0] : memref<256x32xf32, #tpu.memory_space<vmem>>, vector<256x32xf32>
    %c0_1 = arith.constant 0 : index
    %c0_2 = arith.constant 0 : index
    %4 = vector.load %arg2[%c0_1, %c0_2] : memref<256x1xf32, #tpu.memory_space<vmem>>, vector<256x1xf32>
    %c0_3 = arith.constant 0 : index
    %c0_4 = arith.constant 0 : index
    %5 = vector.load %arg3[%c0_3, %c0_4] : memref<32x128xf32, #tpu.memory_space<vmem>>, vector<32x128xf32>
    %cst = arith.constant dense<0.000000e+00> : vector<256x128xf32>
    %6 = tpu.matmul %3, %5, %cst {dimension_numbers = #tpu.dot_dimension_numbers<[1], [0], [0], [1], [0, 0, 1, 1], [], []>} : vector<256x32xf32>, vector<32x128xf32>, vector<256x128xf32> -> vector<256x128xf32>
    %c0_5 = arith.constant 0 : index
    %c0_6 = arith.constant 0 : index
    %7 = vector.load %arg5[%c0_5, %c0_6] : memref<8x128xf32, #tpu.memory_space<vmem>>, vector<1x128xf32>
    %8 = vector.broadcast %4 : vector<256x1xf32> to vector<256x128xf32>
    %9 = vector.broadcast %7 : vector<1x128xf32> to vector<256x128xf32>
    %10 = arith.mulf %8, %9 : vector<256x128xf32>
    %11 = arith.addf %6, %10 : vector<256x128xf32>
    %c1 = arith.constant 1 : index
    %c0_7 = arith.constant 0 : index
    %12 = vector.load %arg5[%c1, %c0_7] : memref<8x128xf32, #tpu.memory_space<vmem>>, vector<1x128xf32>
    %13 = vector.broadcast %12 : vector<1x128xf32> to vector<256x128xf32>
    %14 = arith.addf %11, %13 : vector<256x128xf32>
    %c2 = arith.constant 2 : index
    %c0_8 = arith.constant 0 : index
    %15 = vector.load %arg5[%c2, %c0_8] : memref<8x128xf32, #tpu.memory_space<vmem>>, vector<1x128xf32>
    %c3 = arith.constant 3 : index
    %c0_9 = arith.constant 0 : index
    %16 = vector.load %arg5[%c3, %c0_9] : memref<8x128xf32, #tpu.memory_space<vmem>>, vector<1x128xf32>
    %cst_10 = arith.constant dense<0.000000e+00> : vector<256xf32>
    %17 = vector.multi_reduction <add>, %14, %cst_10 [1] : vector<256x128xf32> to vector<256xf32>
    %18 = vector.shape_cast %17 : vector<256xf32> to vector<256x1xf32>
    %cst_11 = arith.constant 1.562500e-02 : f32
    %19 = vector.broadcast %cst_11 : f32 to vector<256x1xf32>
    %20 = arith.mulf %18, %19 : vector<256x1xf32>
    %21 = vector.broadcast %20 : vector<256x1xf32> to vector<256x128xf32>
    %22 = arith.subf %14, %21 : vector<256x128xf32>
    %cst_12 = arith.constant 0.000000e+00 : f32
    %23 = vector.shape_cast %2 : vector<1x128xi1> to vector<1x128xi1>
    %24 = vector.broadcast %23 : vector<1x128xi1> to vector<256x128xi1>
    %25 = vector.broadcast %cst_12 : f32 to vector<256x128xf32>
    %26 = arith.select %24, %22, %25 : vector<256x128xi1>, vector<256x128xf32>
    %27 = arith.mulf %26, %26 : vector<256x128xf32>
    %cst_13 = arith.constant dense<0.000000e+00> : vector<256xf32>
    %28 = vector.multi_reduction <add>, %27, %cst_13 [1] : vector<256x128xf32> to vector<256xf32>
    %29 = vector.shape_cast %28 : vector<256xf32> to vector<256x1xf32>
    %cst_14 = arith.constant 1.562500e-02 : f32
    %30 = vector.broadcast %cst_14 : f32 to vector<256x1xf32>
    %31 = arith.mulf %29, %30 : vector<256x1xf32>
    %cst_15 = arith.constant 9.99999974E-6 : f32
    %32 = vector.broadcast %cst_15 : f32 to vector<256x1xf32>
    %33 = arith.addf %31, %32 : vector<256x1xf32>
    %34 = math.rsqrt %33 : vector<256x1xf32>
    %35 = vector.broadcast %34 : vector<256x1xf32> to vector<256x128xf32>
    %36 = arith.mulf %26, %35 : vector<256x128xf32>
    %37 = vector.broadcast %15 : vector<1x128xf32> to vector<256x128xf32>
    %38 = arith.mulf %36, %37 : vector<256x128xf32>
    %39 = vector.broadcast %16 : vector<1x128xf32> to vector<256x128xf32>
    %40 = arith.addf %38, %39 : vector<256x128xf32>
    %cst_16 = arith.constant 0.000000e+00 : f32
    %41 = vector.broadcast %cst_16 : f32 to vector<256x128xf32>
    %42 = arith.maximumf %40, %41 : vector<256x128xf32>
    %c0_17 = arith.constant 0 : index
    %c0_18 = arith.constant 0 : index
    %c0_19 = arith.constant 0 : index
    %43 = vector.load %arg4[%c0_17, %c0_18, %c0_19] : memref<2x128x128xf32, #tpu.memory_space<vmem>>, vector<1x128x128xf32>
    %44 = vector.shape_cast %43 : vector<1x128x128xf32> to vector<128x128xf32>
    %cst_20 = arith.constant dense<0.000000e+00> : vector<256x128xf32>
    %45 = tpu.matmul %42, %44, %cst_20 {dimension_numbers = #tpu.dot_dimension_numbers<[1], [0], [0], [1], [0, 0, 1, 1], [], []>} : vector<256x128xf32>, vector<128x128xf32>, vector<256x128xf32> -> vector<256x128xf32>
    %c4 = arith.constant 4 : index
    %c0_21 = arith.constant 0 : index
    %46 = vector.load %arg5[%c4, %c0_21] : memref<8x128xf32, #tpu.memory_space<vmem>>, vector<1x128xf32>
    %47 = vector.broadcast %46 : vector<1x128xf32> to vector<256x128xf32>
    %48 = arith.addf %45, %47 : vector<256x128xf32>
    %c5 = arith.constant 5 : index
    %c0_22 = arith.constant 0 : index
    %49 = vector.load %arg5[%c5, %c0_22] : memref<8x128xf32, #tpu.memory_space<vmem>>, vector<1x128xf32>
    %c6 = arith.constant 6 : index
    %c0_23 = arith.constant 0 : index
    %50 = vector.load %arg5[%c6, %c0_23] : memref<8x128xf32, #tpu.memory_space<vmem>>, vector<1x128xf32>
    %cst_24 = arith.constant dense<0.000000e+00> : vector<256xf32>
    %51 = vector.multi_reduction <add>, %48, %cst_24 [1] : vector<256x128xf32> to vector<256xf32>
    %52 = vector.shape_cast %51 : vector<256xf32> to vector<256x1xf32>
    %cst_25 = arith.constant 1.562500e-02 : f32
    %53 = vector.broadcast %cst_25 : f32 to vector<256x1xf32>
    %54 = arith.mulf %52, %53 : vector<256x1xf32>
    %55 = vector.broadcast %54 : vector<256x1xf32> to vector<256x128xf32>
    %56 = arith.subf %48, %55 : vector<256x128xf32>
    %cst_26 = arith.constant 0.000000e+00 : f32
    %57 = vector.shape_cast %2 : vector<1x128xi1> to vector<1x128xi1>
    %58 = vector.broadcast %57 : vector<1x128xi1> to vector<256x128xi1>
    %59 = vector.broadcast %cst_26 : f32 to vector<256x128xf32>
    %60 = arith.select %58, %56, %59 : vector<256x128xi1>, vector<256x128xf32>
    %61 = arith.mulf %60, %60 : vector<256x128xf32>
    %cst_27 = arith.constant dense<0.000000e+00> : vector<256xf32>
    %62 = vector.multi_reduction <add>, %61, %cst_27 [1] : vector<256x128xf32> to vector<256xf32>
    %63 = vector.shape_cast %62 : vector<256xf32> to vector<256x1xf32>
    %cst_28 = arith.constant 1.562500e-02 : f32
    %64 = vector.broadcast %cst_28 : f32 to vector<256x1xf32>
    %65 = arith.mulf %63, %64 : vector<256x1xf32>
    %cst_29 = arith.constant 9.99999974E-6 : f32
    %66 = vector.broadcast %cst_29 : f32 to vector<256x1xf32>
    %67 = arith.addf %65, %66 : vector<256x1xf32>
    %68 = math.rsqrt %67 : vector<256x1xf32>
    %69 = vector.broadcast %68 : vector<256x1xf32> to vector<256x128xf32>
    %70 = arith.mulf %60, %69 : vector<256x128xf32>
    %71 = vector.broadcast %49 : vector<1x128xf32> to vector<256x128xf32>
    %72 = arith.mulf %70, %71 : vector<256x128xf32>
    %73 = vector.broadcast %50 : vector<1x128xf32> to vector<256x128xf32>
    %74 = arith.addf %72, %73 : vector<256x128xf32>
    %cst_30 = arith.constant 0.000000e+00 : f32
    %75 = vector.broadcast %cst_30 : f32 to vector<256x128xf32>
    %76 = arith.maximumf %74, %75 : vector<256x128xf32>
    %c1_31 = arith.constant 1 : index
    %c0_32 = arith.constant 0 : index
    %c0_33 = arith.constant 0 : index
    %77 = vector.load %arg4[%c1_31, %c0_32, %c0_33] : memref<2x128x128xf32, #tpu.memory_space<vmem>>, vector<1x128x128xf32>
    %78 = vector.shape_cast %77 : vector<1x128x128xf32> to vector<128x128xf32>
    %cst_34 = arith.constant dense<0.000000e+00> : vector<256x128xf32>
    %79 = tpu.matmul %76, %78, %cst_34 {dimension_numbers = #tpu.dot_dimension_numbers<[1], [0], [0], [1], [0, 0, 1, 1], [], []>} : vector<256x128xf32>, vector<128x128xf32>, vector<256x128xf32> -> vector<256x128xf32>
    %c7 = arith.constant 7 : index
    %c0_35 = arith.constant 0 : index
    %80 = vector.load %arg5[%c7, %c0_35] : memref<8x128xf32, #tpu.memory_space<vmem>>, vector<1x128xf32>
    %81 = vector.broadcast %80 : vector<1x128xf32> to vector<256x128xf32>
    %82 = arith.addf %79, %81 : vector<256x128xf32>
    %c0_36 = arith.constant 0 : index
    %c0_37 = arith.constant 0 : index
    %83 = vector.load %arg6[%c0_36, %c0_37] : memref<256x128xf32, #tpu.memory_space<vmem>>, vector<256x128xf32>
    tpu.vector_store %arg6[%c0_36, %c0_37], %82 {strides = array<i32>} : memref<256x128xf32, #tpu.memory_space<vmem>>, vector<256x128xf32>,
    return
  }
  func.func @transform_0(%arg0: i32) -> (i32, i32) {
    %c0_i32 = arith.constant 0 : i32
    %c0_i32_0 = arith.constant 0 : i32
    return %arg0, %c0_i32 : i32, i32
  }
  func.func @transform_1(%arg0: i32) -> (i32, i32) {
    %c0_i32 = arith.constant 0 : i32
    %c0_i32_0 = arith.constant 0 : i32
    return %arg0, %c0_i32 : i32, i32
  }
  func.func @transform_2(%arg0: i32) -> (i32, i32) {
    %c0_i32 = arith.constant 0 : i32
    %c0_i32_0 = arith.constant 0 : i32
    %c0_i32_1 = arith.constant 0 : i32
    return %c0_i32, %c0_i32_0 : i32, i32
  }
  func.func @transform_3(%arg0: i32) -> (i32, i32, i32) {
    %c0_i32 = arith.constant 0 : i32
    %c0_i32_0 = arith.constant 0 : i32
    %c0_i32_1 = arith.constant 0 : i32
    %c0_i32_2 = arith.constant 0 : i32
    return %c0_i32, %c0_i32_0, %c0_i32_1 : i32, i32, i32
  }
  func.func @transform_4(%arg0: i32) -> (i32, i32) {
    %c0_i32 = arith.constant 0 : i32
    %c0_i32_0 = arith.constant 0 : i32
    %c0_i32_1 = arith.constant 0 : i32
    return %c0_i32, %c0_i32_0 : i32, i32
  }
  func.func @transform_5(%arg0: i32) -> (i32, i32) {
    %c0_i32 = arith.constant 0 : i32
    %c0_i32_0 = arith.constant 0 : i32
    return %arg0, %c0_i32 : i32, i32
  }
}

</mosaic_0001>

<llo_original>
// kernel: _lambda_.1
$region0: #{_lambda_.1}
  #allocation0 [shape = 'u32[]', space=smem, size = 0x4, offset = 0x4, fixed_abs, tag = 'smem constant byte address 0x4 - core index']
  #allocation1 [shape = 'u32[144,128]{1,0:T(1,128)}', space=vmem, size = 0x12000, scoped, tag = 'internal scratch']
  %s0 = inlined_call_operand.vmem [shape: f32[256,32], index: 0, kind: input, shape index: {}]
  %s1 = inlined_call_operand.vmem [shape: f32[256,1], index: 1, kind: input, shape index: {}]
  %s2 = inlined_call_operand.vmem [shape: f32[32,128], index: 2, kind: input, shape index: {}]
  %s3 = inlined_call_operand.vmem [shape: f32[2,128,128], index: 3, kind: input, shape index: {}]
  %s4 = inlined_call_operand.vmem [shape: f32[8,128], index: 4, kind: input, shape index: {}]
  %s5 = inlined_call_operand.vmem [shape: f32[256,128], index: 5, kind: output, shape index: {}]
  %s6 = sld [smem:[#allocation0]]
  $region30: #{_lambda_.1} parent=0
    _
  %s8 = ssub.s32 1, %s6
  %s9 = scalar_select 0, %s8, %s6
  // Predicated region
  $region2: #{_lambda_.1} parent=0 // pred_check
    _
  $region3: #{_lambda_.1} parent=0 // pred_check_branch
    %11 = sbr.rel (0) target = $region5
  $region4: #{_lambda_.1} parent=0 // pred_region
    _
  $region5: #{_lambda_.1} parent=0 // pred_fallthru
    _
  // Predicated region
  $region6: #{_lambda_.1} parent=0 // pred_check
    _
  $region7: #{_lambda_.1} parent=0 // pred_check_branch
    %13 = sbr.rel (0) target = $region9
  $region8: #{_lambda_.1} parent=0 // pred_region
    _
  $region9: #{_lambda_.1} parent=0 // pred_fallthru
    _
  // Predicated region
  $region10: #{_lambda_.1} parent=0 // pred_check
    _
  $region11: #{_lambda_.1} parent=0 // pred_check_branch
    %15 = sbr.rel (0) target = $region13
  $region12: #{_lambda_.1} parent=0 // pred_region
    _
  $region13: #{_lambda_.1} parent=0 // pred_fallthru
    _
  // Predicated region
  $region14: #{_lambda_.1} parent=0 // pred_check
    _
  $region15: #{_lambda_.1} parent=0 // pred_check_branch
    %17 = sbr.rel (0) target = $region17
  $region16: #{_lambda_.1} parent=0 // pred_region
    _
  $region17: #{_lambda_.1} parent=0 // pred_fallthru
    _
  // Predicated region
  $region18: #{_lambda_.1} parent=0 // pred_check
    _
  $region19: #{_lambda_.1} parent=0 // pred_check_branch
    %19 = sbr.rel (0) target = $region21
  $region20: #{_lambda_.1} parent=0 // pred_region
    _
  $region21: #{_lambda_.1} parent=0 // pred_fallthru
    _
  %v20 = vlaneseq
  %v21 = vand.u32 %v20, 127
  %vm22 = vcmp.lt.s32.totalorder %v21, 64
  %v23 = vld [vmem:[%s0] sm:$0xff]
  %v24 = vld [vmem:[%s0 + $0x8] sm:$0xff]
  %v25 = vld [vmem:[%s0 + $0x10] sm:$0xff]
  %v26 = vld [vmem:[%s0 + $0x18] sm:$0xff]
  %v27 = vld [vmem:[%s0 + $0x20] sm:$0xff]
  %v28 = vld [vmem:[%s0 + $0x28] sm:$0xff]
  %v29 = vld [vmem:[%s0 + $0x30] sm:$0xff]
  %v30 = vld [vmem:[%s0 + $0x38] sm:$0xff]
  %v31 = vld [vmem:[%s0 + $0x40] sm:$0xff]
  %v32 = vld [vmem:[%s0 + $0x48] sm:$0xff]
  %v33 = vld [vmem:[%s0 + $0x50] sm:$0xff]
  %v34 = vld [vmem:[%s0 + $0x58] sm:$0xff]
  %v35 = vld [vmem:[%s0 + $0x60] sm:$0xff]
  %v36 = vld [vmem:[%s0 + $0x68] sm:$0xff]
  %v37 = vld [vmem:[%s0 + $0x70] sm:$0xff]
  %v38 = vld [vmem:[%s0 + $0x78] sm:$0xff]
  %v39 = vld [vmem:[%s0 + $0x80] sm:$0xff]
  %v40 = vld [vmem:[%s0 + $0x88] sm:$0xff]
  %v41 = vld [vmem:[%s0 + $0x90] sm:$0xff]
  %v42 = vld [vmem:[%s0 + $0x98] sm:$0xff]
  %v43 = vld [vmem:[%s0 + $0xa0] sm:$0xff]
  %v44 = vld [vmem:[%s0 + $0xa8] sm:$0xff]
  %v45 = vld [vmem:[%s0 + $0xb0] sm:$0xff]
  %v46 = vld [vmem:[%s0 + $0xb8] sm:$0xff]
  %v47 = vld [vmem:[%s0 + $0xc0] sm:$0xff]
  %v48 = vld [vmem:[%s0 + $0xc8] sm:$0xff]
  %v49 = vld [vmem:[%s0 + $0xd0] sm:$0xff]
  %v50 = vld [vmem:[%s0 + $0xd8] sm:$0xff]
  %v51 = vld [vmem:[%s0 + $0xe0] sm:$0xff]
  %v52 = vld [vmem:[%s0 + $0xe8] sm:$0xff]
  %v53 = vld [vmem:[%s0 + $0xf0] sm:$0xff]
  %v54 = vld [vmem:[%s0 + $0xf8] sm:$0xff]
  %v55 = vld [vmem:[%s1] sm:$0xff]
  %v56 = vld [vmem:[%s1 + $0x8] sm:$0xff]
  %v57 = vld [vmem:[%s1 + $0x10] sm:$0xff]
  %v58 = vld [vmem:[%s1 + $0x18] sm:$0xff]
  %v59 = vld [vmem:[%s1 + $0x20] sm:$0xff]
  %v60 = vld [vmem:[%s1 + $0x28] sm:$0xff]
  %v61 = vld [vmem:[%s1 + $0x30] sm:$0xff]
  %v62 = vld [vmem:[%s1 + $0x38] sm:$0xff]
  %v63 = vld [vmem:[%s1 + $0x40] sm:$0xff]
  %v64 = vld [vmem:[%s1 + $0x48] sm:$0xff]
  %v65 = vld [vmem:[%s1 + $0x50] sm:$0xff]
  %v66 = vld [vmem:[%s1 + $0x58] sm:$0xff]
  %v67 = vld [vmem:[%s1 + $0x60] sm:$0xff]
  %v68 = vld [vmem:[%s1 + $0x68] sm:$0xff]
  %v69 = vld [vmem:[%s1 + $0x70] sm:$0xff]
  %v70 = vld [vmem:[%s1 + $0x78] sm:$0xff]
  %v71 = vld [vmem:[%s1 + $0x80] sm:$0xff]
  %v72 = vld [vmem:[%s1 + $0x88] sm:$0xff]
  %v73 = vld [vmem:[%s1 + $0x90] sm:$0xff]
  %v74 = vld [vmem:[%s1 + $0x98] sm:$0xff]
  %v75 = vld [vmem:[%s1 + $0xa0] sm:$0xff]
  %v76 = vld [vmem:[%s1 + $0xa8] sm:$0xff]
  %v77 = vld [vmem:[%s1 + $0xb0] sm:$0xff]
  %v78 = vld [vmem:[%s1 + $0xb8] sm:$0xff]
  %v79 = vld [vmem:[%s1 + $0xc0] sm:$0xff]
  %v80 = vld [vmem:[%s1 + $0xc8] sm:$0xff]
  %v81 = vld [vmem:[%s1 + $0xd0] sm:$0xff]
  %v82 = vld [vmem:[%s1 + $0xd8] sm:$0xff]
  %v83 = vld [vmem:[%s1 + $0xe0] sm:$0xff]
  %v84 = vld [vmem:[%s1 + $0xe8] sm:$0xff]
  %v85 = vld [vmem:[%s1 + $0xf0] sm:$0xff]
  %v86 = vld [vmem:[%s1 + $0xf8] sm:$0xff]
  %v87 = vld [vmem:[%s2] sm:$0xff]
  %v88 = vld [vmem:[%s2 + $0x8] sm:$0xff]
  %v89 = vld [vmem:[%s2 + $0x10] sm:$0xff]
  %v90 = vld [vmem:[%s2 + $0x18] sm:$0xff]
  %v91 = vld [vmem:[%s4] sm:$0x1]
  %93 = vset.pattern.permute.xlu0 0
  %94 = vperm.xlu0 %93, %v55
  %v95 = vpop.permute.xlu0 %94
  %98 = vset.pattern.permute.xlu0 0
  %99 = vperm.xlu0 %98, %v56
  %v100 = vpop.permute.xlu0 %99
  %103 = vset.pattern.permute.xlu0 0
  %104 = vperm.xlu0 %103, %v57
  %v105 = vpop.permute.xlu0 %104
  %108 = vset.pattern.permute.xlu0 0
  %109 = vperm.xlu0 %108, %v58
  %v110 = vpop.permute.xlu0 %109
  %113 = vset.pattern.permute.xlu0 0
  %114 = vperm.xlu0 %113, %v59
  %v115 = vpop.permute.xlu0 %114
  %118 = vset.pattern.permute.xlu0 0
  %119 = vperm.xlu0 %118, %v60
  %v120 = vpop.permute.xlu0 %119
  %123 = vset.pattern.permute.xlu0 0
  %124 = vperm.xlu0 %123, %v61
  %v125 = vpop.permute.xlu0 %124
  %128 = vset.pattern.permute.xlu0 0
  %129 = vperm.xlu0 %128, %v62
  %v130 = vpop.permute.xlu0 %129
  %133 = vset.pattern.permute.xlu0 0
  %134 = vperm.xlu0 %133, %v63
  %v135 = vpop.permute.xlu0 %134
  %138 = vset.pattern.permute.xlu0 0
  %139 = vperm.xlu0 %138, %v64
  %v140 = vpop.permute.xlu0 %139
  %143 = vset.pattern.permute.xlu0 0
  %144 = vperm.xlu0 %143, %v65
  %v145 = vpop.permute.xlu0 %144
  %148 = vset.pattern.permute.xlu0 0
  %149 = vperm.xlu0 %148, %v66
  %v150 = vpop.permute.xlu0 %149
  %153 = vset.pattern.permute.xlu0 0
  %154 = vperm.xlu0 %153, %v67
  %v155 = vpop.permute.xlu0 %154
  %158 = vset.pattern.permute.xlu0 0
  %159 = vperm.xlu0 %158, %v68
  %v160 = vpop.permute.xlu0 %159
  %163 = vset.pattern.permute.xlu0 0
  %164 = vperm.xlu0 %163, %v69
  %v165 = vpop.permute.xlu0 %164
  %168 = vset.pattern.permute.xlu0 0
  %169 = vperm.xlu0 %168, %v70
  %v170 = vpop.permute.xlu0 %169
  %173 = vset.pattern.permute.xlu0 0
  %174 = vperm.xlu0 %173, %v71
  %v175 = vpop.permute.xlu0 %174
  %178 = vset.pattern.permute.xlu0 0
  %179 = vperm.xlu0 %178, %v72
  %v180 = vpop.permute.xlu0 %179
  %183 = vset.pattern.permute.xlu0 0
  %184 = vperm.xlu0 %183, %v73
  %v185 = vpop.permute.xlu0 %184
  %188 = vset.pattern.permute.xlu0 0
  %189 = vperm.xlu0 %188, %v74
  %v190 = vpop.permute.xlu0 %189
  %193 = vset.pattern.permute.xlu0 0
  %194 = vperm.xlu0 %193, %v75
  %v195 = vpop.permute.xlu0 %194
  %198 = vset.pattern.permute.xlu0 0
  %199 = vperm.xlu0 %198, %v76
  %v200 = vpop.permute.xlu0 %199
  %203 = vset.pattern.permute.xlu0 0
  %204 = vperm.xlu0 %203, %v77
  %v205 = vpop.permute.xlu0 %204
  %208 = vset.pattern.permute.xlu0 0
  %209 = vperm.xlu0 %208, %v78
  %v210 = vpop.permute.xlu0 %209
  %213 = vset.pattern.permute.xlu0 0
  %214 = vperm.xlu0 %213, %v79
  %v215 = vpop.permute.xlu0 %214
  %218 = vset.pattern.permute.xlu0 0
  %219 = vperm.xlu0 %218, %v80
  %v220 = vpop.permute.xlu0 %219
  %223 = vset.pattern.permute.xlu0 0
  %224 = vperm.xlu0 %223, %v81
  %v225 = vpop.permute.xlu0 %224
  %228 = vset.pattern.permute.xlu0 0
  %229 = vperm.xlu0 %228, %v82
  %v230 = vpop.permute.xlu0 %229
  %233 = vset.pattern.permute.xlu0 0
  %234 = vperm.xlu0 %233, %v83
  %v235 = vpop.permute.xlu0 %234
  %238 = vset.pattern.permute.xlu0 0
  %239 = vperm.xlu0 %238, %v84
  %v240 = vpop.permute.xlu0 %239
  %243 = vset.pattern.permute.xlu0 0
  %244 = vperm.xlu0 %243, %v85
  %v245 = vpop.permute.xlu0 %244
  %248 = vset.pattern.permute.xlu0 0
  %249 = vperm.xlu0 %248, %v86
  %v250 = vpop.permute.xlu0 %249
  %v252 = vlaneseq
  %v253 = vshrl.u32 %v252, 7
  %v254 = vsub.s32 0, %v253
  %v255 = vrot.slane %v91, %v254
  %v256 = vmul.f32 %v95, %v255
  %v257 = vmul.f32 %v100, %v255
  %v258 = vmul.f32 %v105, %v255
  %v259 = vmul.f32 %v110, %v255
  %v260 = vmul.f32 %v115, %v255
  %v261 = vmul.f32 %v120, %v255
  %v262 = vmul.f32 %v125, %v255
  %v263 = vmul.f32 %v130, %v255
  %v264 = vmul.f32 %v135, %v255
  %v265 = vmul.f32 %v140, %v255
  %v266 = vmul.f32 %v145, %v255
  %v267 = vmul.f32 %v150, %v255
  %v268 = vmul.f32 %v155, %v255
  %v269 = vmul.f32 %v160, %v255
  %v270 = vmul.f32 %v165, %v255
  %v271 = vmul.f32 %v170, %v255
  %v272 = vmul.f32 %v175, %v255
  %v273 = vmul.f32 %v180, %v255
  %v274 = vmul.f32 %v185, %v255
  %v275 = vmul.f32 %v190, %v255
  %v276 = vmul.f32 %v195, %v255
  %v277 = vmul.f32 %v200, %v255
  %v278 = vmul.f32 %v205, %v255
  %v279 = vmul.f32 %v210, %v255
  %v280 = vmul.f32 %v215, %v255
  %v281 = vmul.f32 %v220, %v255
  %v282 = vmul.f32 %v225, %v255
  %v283 = vmul.f32 %v230, %v255
  %v284 = vmul.f32 %v235, %v255
  %v285 = vmul.f32 %v240, %v255
  %v286 = vmul.f32 %v245, %v255
  %v287 = vmul.f32 %v250, %v255
  %vm288 = vcmask 261120
  %v290 = vsel %vm288, %v23, 0
  %v293 = vsel %vm288, %v24, 0
  %v296 = vsel %vm288, %v25, 0
  %v299 = vsel %vm288, %v26, 0
  %v302 = vsel %vm288, %v27, 0
  %v305 = vsel %vm288, %v28, 0
  %v308 = vsel %vm288, %v29, 0
  %v311 = vsel %vm288, %v30, 0
  %v314 = vsel %vm288, %v31, 0
  %v317 = vsel %vm288, %v32, 0
  %v320 = vsel %vm288, %v33, 0
  %v323 = vsel %vm288, %v34, 0
  %v326 = vsel %vm288, %v35, 0
  %v329 = vsel %vm288, %v36, 0
  %v332 = vsel %vm288, %v37, 0
  %v335 = vsel %vm288, %v38, 0
  %v338 = vsel %vm288, %v39, 0
  %v341 = vsel %vm288, %v40, 0
  %v344 = vsel %vm288, %v41, 0
  %v347 = vsel %vm288, %v42, 0
  %v350 = vsel %vm288, %v43, 0
  %v353 = vsel %vm288, %v44, 0
  %v356 = vsel %vm288, %v45, 0
  %v359 = vsel %vm288, %v46, 0
  %v362 = vsel %vm288, %v47, 0
  %v365 = vsel %vm288, %v48, 0
  %v368 = vsel %vm288, %v49, 0
  %v371 = vsel %vm288, %v50, 0
  %v374 = vsel %vm288, %v51, 0
  %v377 = vsel %vm288, %v52, 0
  %v380 = vsel %vm288, %v53, 0
  %v383 = vsel %vm288, %v54, 0
  %385 = vmatprep.subr.mxu0 0.0
  %386 = vmatpush1.msra.mxu0 0.0
  %387 = vmatprep.subr.mxu0 0.0
  %388 = vmatpush1.msra.mxu0 0.0
  %389 = vmatprep.subr.mxu0 0.0
  %390 = vmatpush1.msra.mxu0 0.0
  %391 = vmatprep.subr.mxu0 0.0
  %392 = vmatpush1.msra.mxu0 0.0
  %393 = vmatprep.subr.mxu0 0.0
  %394 = vmatpush1.msra.mxu0 0.0
  %395 = vmatprep.subr.mxu0 0.0
  %396 = vmatpush1.msra.mxu0 0.0
  %397 = vmatprep.subr.mxu0 0.0
  %398 = vmatpush1.msra.mxu0 0.0
  %399 = vmatprep.subr.mxu0 0.0
  %400 = vmatpush1.msra.mxu0 0.0
  %401 = vmatprep.subr.mxu0 0.0
  %402 = vmatpush1.msra.mxu0 0.0
  %403 = vmatprep.subr.mxu0 0.0
  %404 = vmatpush1.msra.mxu0 0.0
  %405 = vmatprep.subr.mxu0 0.0
  %406 = vmatpush1.msra.mxu0 0.0
  %407 = vmatprep.subr.mxu0 0.0
  %408 = vmatpush1.msra.mxu0 0.0
  %409 = vmatprep.subr.mxu0 0.0
  %410 = vmatpush1.msra.mxu0 %v90
  %411 = vmatprep.subr.mxu0 0.0
  %412 = vmatpush1.msra.mxu0 %v89
  %413 = vmatprep.subr.mxu0 0.0
  %414 = vmatpush1.msra.mxu0 %v88
  %415 = vmatprep.subr.mxu0 0.0
  %416 = vmatpush1.msra.mxu0 %v87
  %417 = vmatprep.subr.mxu0 0.0
  %418 = vmatpush2.msra.mxu0 0.0
  %419 = vmatprep.subr.mxu0 0.0
  %420 = vmatpush2.msra.mxu0 0.0
  %421 = vmatprep.subr.mxu0 0.0
  %422 = vmatpush2.msra.mxu0 0.0
  %423 = vmatprep.subr.mxu0 0.0
  %424 = vmatpush2.msra.mxu0 0.0
  %425 = vmatprep.subr.mxu0 0.0
  %426 = vmatpush2.msra.mxu0 0.0
  %427 = vmatprep.subr.mxu0 0.0
  %428 = vmatpush2.msra.mxu0 0.0
  %429 = vmatprep.subr.mxu0 0.0
  %430 = vmatpush2.msra.mxu0 0.0
  %431 = vmatprep.subr.mxu0 0.0
  %432 = vmatpush2.msra.mxu0 0.0
  %433 = vmatprep.subr.mxu0 0.0
  %434 = vmatpush2.msra.mxu0 0.0
  %435 = vmatprep.subr.mxu0 0.0
  %436 = vmatpush2.msra.mxu0 0.0
  %437 = vmatprep.subr.mxu0 0.0
  %438 = vmatpush2.msra.mxu0 0.0
  %439 = vmatprep.subr.mxu0 0.0
  %440 = vmatpush2.msra.mxu0 0.0
  %441 = vmatprep.subr.mxu0 0.0
  %442 = vmatpush2.msra.mxu0 0.0
  %443 = vmatprep.subr.mxu0 0.0
  %444 = vmatpush2.msra.mxu0 0.0
  %445 = vmatprep.subr.mxu0 0.0
  %446 = vmatpush2.msra.mxu0 0.0
  %447 = vmatprep.subr.mxu0 0.0
  %448 = vmatpush2.msra.mxu0 0.0
  %449 = vmatprep.mubr.f32.mxu0 0.0
  %450 = vmatmul.mubr.f32.gmra.mxu0 %v290
  %v451 = vpop.f32.mrf.mxu0
  %v452 = vadd.f32 %v256, %v451
  %v453 = vpop.f32.mrf.mxu0
  %454 = vmatprep.mubr.f32.mxu0 0.0
  %455 = vmatmul.mubr.f32.gmra.mxu0 %v293
  %v456 = vpop.f32.mrf.mxu0
  %v457 = vadd.f32 %v257, %v456
  %v458 = vpop.f32.mrf.mxu0
  %459 = vmatprep.mubr.f32.mxu0 0.0
  %460 = vmatmul.mubr.f32.gmra.mxu0 %v296
  %v461 = vpop.f32.mrf.mxu0
  %v462 = vadd.f32 %v258, %v461
  %v463 = vpop.f32.mrf.mxu0
  %464 = vmatprep.mubr.f32.mxu0 0.0
  %465 = vmatmul.mubr.f32.gmra.mxu0 %v299
  %v466 = vpop.f32.mrf.mxu0
  %v467 = vadd.f32 %v259, %v466
  %v468 = vpop.f32.mrf.mxu0
  %469 = vmatprep.mubr.f32.mxu0 0.0
  %470 = vmatmul.mubr.f32.gmra.mxu0 %v302
  %v471 = vpop.f32.mrf.mxu0
  %v472 = vadd.f32 %v260, %v471
  %v473 = vpop.f32.mrf.mxu0
  %474 = vmatprep.mubr.f32.mxu0 0.0
  %475 = vmatmul.mubr.f32.gmra.mxu0 %v305
  %v476 = vpop.f32.mrf.mxu0
  %v477 = vadd.f32 %v261, %v476
  %v478 = vpop.f32.mrf.mxu0
  %479 = vmatprep.mubr.f32.mxu0 0.0
  %480 = vmatmul.mubr.f32.gmra.mxu0 %v308
  %v481 = vpop.f32.mrf.mxu0
  %v482 = vadd.f32 %v262, %v481
  %v483 = vpop.f32.mrf.mxu0
  %484 = vmatprep.mubr.f32.mxu0 0.0
  %485 = vmatmul.mubr.f32.gmra.mxu0 %v311
  %v486 = vpop.f32.mrf.mxu0
  %v487 = vadd.f32 %v263, %v486
  %v488 = vpop.f32.mrf.mxu0
  %489 = vmatprep.mubr.f32.mxu0 0.0
  %490 = vmatmul.mubr.f32.gmra.mxu0 %v314
  %v491 = vpop.f32.mrf.mxu0
  %v492 = vadd.f32 %v264, %v491
  %v493 = vpop.f32.mrf.mxu0
  %494 = vmatprep.mubr.f32.mxu0 0.0
  %495 = vmatmul.mubr.f32.gmra.mxu0 %v317
  %v496 = vpop.f32.mrf.mxu0
  %v497 = vadd.f32 %v265, %v496
  %v498 = vpop.f32.mrf.mxu0
  %499 = vmatprep.mubr.f32.mxu0 0.0
  %500 = vmatmul.mubr.f32.gmra.mxu0 %v320
  %v501 = vpop.f32.mrf.mxu0
  %v502 = vadd.f32 %v266, %v501
  %v503 = vpop.f32.mrf.mxu0
  %504 = vmatprep.mubr.f32.mxu0 0.0
  %505 = vmatmul.mubr.f32.gmra.mxu0 %v323
  %v506 = vpop.f32.mrf.mxu0
  %v507 = vadd.f32 %v267, %v506
  %v508 = vpop.f32.mrf.mxu0
  %509 = vmatprep.mubr.f32.mxu0 0.0
  %510 = vmatmul.mubr.f32.gmra.mxu0 %v326
  %v511 = vpop.f32.mrf.mxu0
  %v512 = vadd.f32 %v268, %v511
  %v513 = vpop.f32.mrf.mxu0
  %514 = vmatprep.mubr.f32.mxu0 0.0
  %515 = vmatmul.mubr.f32.gmra.mxu0 %v329
  %v516 = vpop.f32.mrf.mxu0
  %v517 = vadd.f32 %v269, %v516
  %v518 = vpop.f32.mrf.mxu0
  %519 = vmatprep.mubr.f32.mxu0 0.0
  %520 = vmatmul.mubr.f32.gmra.mxu0 %v332
  %v521 = vpop.f32.mrf.mxu0
  %v522 = vadd.f32 %v270, %v521
  %v523 = vpop.f32.mrf.mxu0
  %524 = vmatprep.mubr.f32.mxu0 0.0
  %525 = vmatmul.mubr.f32.gmra.mxu0 %v335
  %v526 = vpop.f32.mrf.mxu0
  %v527 = vadd.f32 %v271, %v526
  %v528 = vpop.f32.mrf.mxu0
  %529 = vmatprep.mubr.f32.mxu0 0.0
  %530 = vmatmul.mubr.f32.gmra.mxu0 %v338
  %v531 = vpop.f32.mrf.mxu0
  %v532 = vadd.f32 %v272, %v531
  %v533 = vpop.f32.mrf.mxu0
  %534 = vmatprep.mubr.f32.mxu0 0.0
  %535 = vmatmul.mubr.f32.gmra.mxu0 %v341
  %v536 = vpop.f32.mrf.mxu0
  %v537 = vadd.f32 %v273, %v536
  %v538 = vpop.f32.mrf.mxu0
  %539 = vmatprep.mubr.f32.mxu0 0.0
  %540 = vmatmul.mubr.f32.gmra.mxu0 %v344
  %v541 = vpop.f32.mrf.mxu0
  %v542 = vadd.f32 %v274, %v541
  %v543 = vpop.f32.mrf.mxu0
  %544 = vmatprep.mubr.f32.mxu0 0.0
  %545 = vmatmul.mubr.f32.gmra.mxu0 %v347
  %v546 = vpop.f32.mrf.mxu0
  %v547 = vadd.f32 %v275, %v546
  %v548 = vpop.f32.mrf.mxu0
  %549 = vmatprep.mubr.f32.mxu0 0.0
  %550 = vmatmul.mubr.f32.gmra.mxu0 %v350
  %v551 = vpop.f32.mrf.mxu0
  %v552 = vadd.f32 %v276, %v551
  %v553 = vpop.f32.mrf.mxu0
  %554 = vmatprep.mubr.f32.mxu0 0.0
  %555 = vmatmul.mubr.f32.gmra.mxu0 %v353
  %v556 = vpop.f32.mrf.mxu0
  %v557 = vadd.f32 %v277, %v556
  %v558 = vpop.f32.mrf.mxu0
  %559 = vmatprep.mubr.f32.mxu0 0.0
  %560 = vmatmul.mubr.f32.gmra.mxu0 %v356
  %v561 = vpop.f32.mrf.mxu0
  %v562 = vadd.f32 %v278, %v561
  %v563 = vpop.f32.mrf.mxu0
  %564 = vmatprep.mubr.f32.mxu0 0.0
  %565 = vmatmul.mubr.f32.gmra.mxu0 %v359
  %v566 = vpop.f32.mrf.mxu0
  %v567 = vadd.f32 %v279, %v566
  %v568 = vpop.f32.mrf.mxu0
  %569 = vmatprep.mubr.f32.mxu0 0.0
  %570 = vmatmul.mubr.f32.gmra.mxu0 %v362
  %v571 = vpop.f32.mrf.mxu0
  %v572 = vadd.f32 %v280, %v571
  %v573 = vpop.f32.mrf.mxu0
  %574 = vmatprep.mubr.f32.mxu0 0.0
  %575 = vmatmul.mubr.f32.gmra.mxu0 %v365
  %v576 = vpop.f32.mrf.mxu0
  %v577 = vadd.f32 %v281, %v576
  %v578 = vpop.f32.mrf.mxu0
  %579 = vmatprep.mubr.f32.mxu0 0.0
  %580 = vmatmul.mubr.f32.gmra.mxu0 %v368
  %v581 = vpop.f32.mrf.mxu0
  %v582 = vadd.f32 %v282, %v581
  %v583 = vpop.f32.mrf.mxu0
  %584 = vmatprep.mubr.f32.mxu0 0.0
  %585 = vmatmul.mubr.f32.gmra.mxu0 %v371
  %v586 = vpop.f32.mrf.mxu0
  %v587 = vadd.f32 %v283, %v586
  %v588 = vpop.f32.mrf.mxu0
  %589 = vmatprep.mubr.f32.mxu0 0.0
  %590 = vmatmul.mubr.f32.gmra.mxu0 %v374
  %v591 = vpop.f32.mrf.mxu0
  %v592 = vadd.f32 %v284, %v591
  %v593 = vpop.f32.mrf.mxu0
  %594 = vmatprep.mubr.f32.mxu0 0.0
  %595 = vmatmul.mubr.f32.gmra.mxu0 %v377
  %v596 = vpop.f32.mrf.mxu0
  %v597 = vadd.f32 %v285, %v596
  %v598 = vpop.f32.mrf.mxu0
  %599 = vmatprep.mubr.f32.mxu0 0.0
  %600 = vmatmul.mubr.f32.gmra.mxu0 %v380
  %v601 = vpop.f32.mrf.mxu0
  %v602 = vadd.f32 %v286, %v601
  %v603 = vpop.f32.mrf.mxu0
  %604 = vmatprep.mubr.f32.mxu0 0.0
  %605 = vmatmul.mubr.f32.gmra.mxu0 %v383
  %v606 = vpop.f32.mrf.mxu0
  %v607 = vadd.f32 %v287, %v606
  %v608 = vpop.f32.mrf.mxu0
  %609 = vdwg.mxu0
  %v610 = vld [vmem:[%s4 + $0x1] sm:$0x1]
  %v611 = vlaneseq
  %v612 = vshrl.u32 %v611, 7
  %v613 = vsub.s32 0, %v612
  %v614 = vrot.slane %v610, %v613
  %v615 = vadd.f32 %v452, %v614
  %v616 = vadd.f32 %v457, %v614
  %v617 = vadd.f32 %v462, %v614
  %v618 = vadd.f32 %v467, %v614
  %v619 = vadd.f32 %v472, %v614
  %v620 = vadd.f32 %v477, %v614
  %v621 = vadd.f32 %v482, %v614
  %v622 = vadd.f32 %v487, %v614
  %v623 = vadd.f32 %v492, %v614
  %v624 = vadd.f32 %v497, %v614
  %v625 = vadd.f32 %v502, %v614
  %v626 = vadd.f32 %v507, %v614
  %v627 = vadd.f32 %v512, %v614
  %v628 = vadd.f32 %v517, %v614
  %v629 = vadd.f32 %v522, %v614
  %v630 = vadd.f32 %v527, %v614
  %v631 = vadd.f32 %v532, %v614
  %v632 = vadd.f32 %v537, %v614
  %v633 = vadd.f32 %v542, %v614
  %v634 = vadd.f32 %v547, %v614
  %v635 = vadd.f32 %v552, %v614
  %v636 = vadd.f32 %v557, %v614
  %v637 = vadd.f32 %v562, %v614
  %v638 = vadd.f32 %v567, %v614
  %v639 = vadd.f32 %v572, %v614
  %v640 = vadd.f32 %v577, %v614
  %v641 = vadd.f32 %v582, %v614
  %v642 = vadd.f32 %v587, %v614
  %v643 = vadd.f32 %v592, %v614
  %v644 = vadd.f32 %v597, %v614
  %v645 = vadd.f32 %v602, %v614
  %v646 = vadd.f32 %v607, %v614
  %v647 = vld [vmem:[%s4 + $0x2] sm:$0x1]
  %v648 = vld [vmem:[%s4 + $0x3] sm:$0x1]
  %649 = vadd.xlane.f32.xlu0 %v615
  %v650 = vpop.xlane.xlu0 %649
  %651 = vadd.xlane.f32.xlu0 %v616
  %v652 = vpop.xlane.xlu0 %651
  %653 = vadd.xlane.f32.xlu0 %v617
  %v654 = vpop.xlane.xlu0 %653
  %655 = vadd.xlane.f32.xlu0 %v618
  %v656 = vpop.xlane.xlu0 %655
  %657 = vadd.xlane.f32.xlu0 %v619
  %v658 = vpop.xlane.xlu0 %657
  %659 = vadd.xlane.f32.xlu0 %v620
  %v660 = vpop.xlane.xlu0 %659
  %661 = vadd.xlane.f32.xlu0 %v621
  %v662 = vpop.xlane.xlu0 %661
  %663 = vadd.xlane.f32.xlu0 %v622
  %v664 = vpop.xlane.xlu0 %663
  %665 = vadd.xlane.f32.xlu0 %v623
  %v666 = vpop.xlane.xlu0 %665
  %667 = vadd.xlane.f32.xlu0 %v624
  %v668 = vpop.xlane.xlu0 %667
  %669 = vadd.xlane.f32.xlu0 %v625
  %v670 = vpop.xlane.xlu0 %669
  %671 = vadd.xlane.f32.xlu0 %v626
  %v672 = vpop.xlane.xlu0 %671
  %673 = vadd.xlane.f32.xlu0 %v627
  %v674 = vpop.xlane.xlu0 %673
  %675 = vadd.xlane.f32.xlu0 %v628
  %v676 = vpop.xlane.xlu0 %675
  %677 = vadd.xlane.f32.xlu0 %v629
  %v678 = vpop.xlane.xlu0 %677
  %679 = vadd.xlane.f32.xlu0 %v630
  %v680 = vpop.xlane.xlu0 %679
  %681 = vadd.xlane.f32.xlu0 %v631
  %v682 = vpop.xlane.xlu0 %681
  %683 = vadd.xlane.f32.xlu0 %v632
  %v684 = vpop.xlane.xlu0 %683
  %685 = vadd.xlane.f32.xlu0 %v633
  %v686 = vpop.xlane.xlu0 %685
  %687 = vadd.xlane.f32.xlu0 %v634
  %v688 = vpop.xlane.xlu0 %687
  %689 = vadd.xlane.f32.xlu0 %v635
  %v690 = vpop.xlane.xlu0 %689
  %691 = vadd.xlane.f32.xlu0 %v636
  %v692 = vpop.xlane.xlu0 %691
  %693 = vadd.xlane.f32.xlu0 %v637
  %v694 = vpop.xlane.xlu0 %693
  %695 = vadd.xlane.f32.xlu0 %v638
  %v696 = vpop.xlane.xlu0 %695
  %697 = vadd.xlane.f32.xlu0 %v639
  %v698 = vpop.xlane.xlu0 %697
  %699 = vadd.xlane.f32.xlu0 %v640
  %v700 = vpop.xlane.xlu0 %699
  %701 = vadd.xlane.f32.xlu0 %v641
  %v702 = vpop.xlane.xlu0 %701
  %703 = vadd.xlane.f32.xlu0 %v642
  %v704 = vpop.xlane.xlu0 %703
  %705 = vadd.xlane.f32.xlu0 %v643
  %v706 = vpop.xlane.xlu0 %705
  %707 = vadd.xlane.f32.xlu0 %v644
  %v708 = vpop.xlane.xlu0 %707
  %709 = vadd.xlane.f32.xlu0 %v645
  %v710 = vpop.xlane.xlu0 %709
  %711 = vadd.xlane.f32.xlu0 %v646
  %v712 = vpop.xlane.xlu0 %711
  %v713 = vmul.f32 %v650, 0.015625
  %v714 = vmul.f32 %v652, 0.015625
  %v715 = vmul.f32 %v654, 0.015625
  %v716 = vmul.f32 %v656, 0.015625
  %v717 = vmul.f32 %v658, 0.015625
  %v718 = vmul.f32 %v660, 0.015625
  %v719 = vmul.f32 %v662, 0.015625
  %v720 = vmul.f32 %v664, 0.015625
  %v721 = vmul.f32 %v666, 0.015625
  %v722 = vmul.f32 %v668, 0.015625
  %v723 = vmul.f32 %v670, 0.015625
  %v724 = vmul.f32 %v672, 0.015625
  %v725 = vmul.f32 %v674, 0.015625
  %v726 = vmul.f32 %v676, 0.015625
  %v727 = vmul.f32 %v678, 0.015625
  %v728 = vmul.f32 %v680, 0.015625
  %v729 = vmul.f32 %v682, 0.015625
  %v730 = vmul.f32 %v684, 0.015625
  %v731 = vmul.f32 %v686, 0.015625
  %v732 = vmul.f32 %v688, 0.015625
  %v733 = vmul.f32 %v690, 0.015625
  %v734 = vmul.f32 %v692, 0.015625
  %v735 = vmul.f32 %v694, 0.015625
  %v736 = vmul.f32 %v696, 0.015625
  %v737 = vmul.f32 %v698, 0.015625
  %v738 = vmul.f32 %v700, 0.015625
  %v739 = vmul.f32 %v702, 0.015625
  %v740 = vmul.f32 %v704, 0.015625
  %v741 = vmul.f32 %v706, 0.015625
  %v742 = vmul.f32 %v708, 0.015625
  %v743 = vmul.f32 %v710, 0.015625
  %v744 = vmul.f32 %v712, 0.015625
  %v745 = vsub.f32 %v615, %v713
  %v746 = vsub.f32 %v616, %v714
  %v747 = vsub.f32 %v617, %v715
  %v748 = vsub.f32 %v618, %v716
  %v749 = vsub.f32 %v619, %v717
  %v750 = vsub.f32 %v620, %v718
  %v751 = vsub.f32 %v621, %v719
  %v752 = vsub.f32 %v622, %v720
  %v753 = vsub.f32 %v623, %v721
  %v754 = vsub.f32 %v624, %v722
  %v755 = vsub.f32 %v625, %v723
  %v756 = vsub.f32 %v626, %v724
  %v757 = vsub.f32 %v627, %v725
  %v758 = vsub.f32 %v628, %v726
  %v759 = vsub.f32 %v629, %v727
  %v760 = vsub.f32 %v630, %v728
  %v761 = vsub.f32 %v631, %v729
  %v762 = vsub.f32 %v632, %v730
  %v763 = vsub.f32 %v633, %v731
  %v764 = vsub.f32 %v634, %v732
  %v765 = vsub.f32 %v635, %v733
  %v766 = vsub.f32 %v636, %v734
  %v767 = vsub.f32 %v637, %v735
  %v768 = vsub.f32 %v638, %v736
  %v769 = vsub.f32 %v639, %v737
  %v770 = vsub.f32 %v640, %v738
  %v771 = vsub.f32 %v641, %v739
  %v772 = vsub.f32 %v642, %v740
  %v773 = vsub.f32 %v643, %v741
  %v774 = vsub.f32 %v644, %v742
  %v775 = vsub.f32 %v645, %v743
  %v776 = vsub.f32 %v646, %v744
  %v777 = vsel %vm22, 1, 0
  %vm778 = vcmp.eq.s32.totalorder %v777, 1
  %v779 = vsel %vm778, %v745, 0.0
  %v780 = vsel %vm778, %v746, 0.0
  %v781 = vsel %vm778, %v747, 0.0
  %v782 = vsel %vm778, %v748, 0.0
  %v783 = vsel %vm778, %v749, 0.0
  %v784 = vsel %vm778, %v750, 0.0
  %v785 = vsel %vm778, %v751, 0.0
  %v786 = vsel %vm778, %v752, 0.0
  %v787 = vsel %vm778, %v753, 0.0
  %v788 = vsel %vm778, %v754, 0.0
  %v789 = vsel %vm778, %v755, 0.0
  %v790 = vsel %vm778, %v756, 0.0
  %v791 = vsel %vm778, %v757, 0.0
  %v792 = vsel %vm778, %v758, 0.0
  %v793 = vsel %vm778, %v759, 0.0
  %v794 = vsel %vm778, %v760, 0.0
  %v795 = vsel %vm778, %v761, 0.0
  %v796 = vsel %vm778, %v762, 0.0
  %v797 = vsel %vm778, %v763, 0.0
  %v798 = vsel %vm778, %v764, 0.0
  %v799 = vsel %vm778, %v765, 0.0
  %v800 = vsel %vm778, %v766, 0.0
  %v801 = vsel %vm778, %v767, 0.0
  %v802 = vsel %vm778, %v768, 0.0
  %v803 = vsel %vm778, %v769, 0.0
  %v804 = vsel %vm778, %v770, 0.0
  %v805 = vsel %vm778, %v771, 0.0
  %v806 = vsel %vm778, %v772, 0.0
  %v807 = vsel %vm778, %v773, 0.0
  %v808 = vsel %vm778, %v774, 0.0
  %v809 = vsel %vm778, %v775, 0.0
  %v810 = vsel %vm778, %v776, 0.0
  %v811 = vmul.f32 %v779, %v779
  %v812 = vmul.f32 %v780, %v780
  %v813 = vmul.f32 %v781, %v781
  %v814 = vmul.f32 %v782, %v782
  %v815 = vmul.f32 %v783, %v783
  %v816 = vmul.f32 %v784, %v784
  %v817 = vmul.f32 %v785, %v785
  %v818 = vmul.f32 %v786, %v786
  %v819 = vmul.f32 %v787, %v787
  %v820 = vmul.f32 %v788, %v788
  %v821 = vmul.f32 %v789, %v789
  %v822 = vmul.f32 %v790, %v790
  %v823 = vmul.f32 %v791, %v791
  %v824 = vmul.f32 %v792, %v792
  %v825 = vmul.f32 %v793, %v793
  %v826 = vmul.f32 %v794, %v794
  %v827 = vmul.f32 %v795, %v795
  %v828 = vmul.f32 %v796, %v796
  %v829 = vmul.f32 %v797, %v797
  %v830 = vmul.f32 %v798, %v798
  %v831 = vmul.f32 %v799, %v799
  %v832 = vmul.f32 %v800, %v800
  %v833 = vmul.f32 %v801, %v801
  %v834 = vmul.f32 %v802, %v802
  %v835 = vmul.f32 %v803, %v803
  %v836 = vmul.f32 %v804, %v804
  %v837 = vmul.f32 %v805, %v805
  %v838 = vmul.f32 %v806, %v806
  %v839 = vmul.f32 %v807, %v807
  %v840 = vmul.f32 %v808, %v808
  %v841 = vmul.f32 %v809, %v809
  %v842 = vmul.f32 %v810, %v810
  %843 = vadd.xlane.f32.xlu0 %v811
  %v844 = vpop.xlane.xlu0 %843
  %845 = vadd.xlane.f32.xlu0 %v812
  %v846 = vpop.xlane.xlu0 %845
  %847 = vadd.xlane.f32.xlu0 %v813
  %v848 = vpop.xlane.xlu0 %847
  %849 = vadd.xlane.f32.xlu0 %v814
  %v850 = vpop.xlane.xlu0 %849
  %851 = vadd.xlane.f32.xlu0 %v815
  %v852 = vpop.xlane.xlu0 %851
  %853 = vadd.xlane.f32.xlu0 %v816
  %v854 = vpop.xlane.xlu0 %853
  %855 = vadd.xlane.f32.xlu0 %v817
  %v856 = vpop.xlane.xlu0 %855
  %857 = vadd.xlane.f32.xlu0 %v818
  %v858 = vpop.xlane.xlu0 %857
  %859 = vadd.xlane.f32.xlu0 %v819
  %v860 = vpop.xlane.xlu0 %859
  %861 = vadd.xlane.f32.xlu0 %v820
  %v862 = vpop.xlane.xlu0 %861
  %863 = vadd.xlane.f32.xlu0 %v821
  %v864 = vpop.xlane.xlu0 %863
  %865 = vadd.xlane.f32.xlu0 %v822
  %v866 = vpop.xlane.xlu0 %865
  %867 = vadd.xlane.f32.xlu0 %v823
  %v868 = vpop.xlane.xlu0 %867
  %869 = vadd.xlane.f32.xlu0 %v824
  %v870 = vpop.xlane.xlu0 %869
  %871 = vadd.xlane.f32.xlu0 %v825
  %v872 = vpop.xlane.xlu0 %871
  %873 = vadd.xlane.f32.xlu0 %v826
  %v874 = vpop.xlane.xlu0 %873
  %875 = vadd.xlane.f32.xlu0 %v827
  %v876 = vpop.xlane.xlu0 %875
  %877 = vadd.xlane.f32.xlu0 %v828
  %v878 = vpop.xlane.xlu0 %877
  %879 = vadd.xlane.f32.xlu0 %v829
  %v880 = vpop.xlane.xlu0 %879
  %881 = vadd.xlane.f32.xlu0 %v830
  %v882 = vpop.xlane.xlu0 %881
  %883 = vadd.xlane.f32.xlu0 %v831
  %v884 = vpop.xlane.xlu0 %883
  %885 = vadd.xlane.f32.xlu0 %v832
  %v886 = vpop.xlane.xlu0 %885
  %887 = vadd.xlane.f32.xlu0 %v833
  %v888 = vpop.xlane.xlu0 %887
  %889 = vadd.xlane.f32.xlu0 %v834
  %v890 = vpop.xlane.xlu0 %889
  %891 = vadd.xlane.f32.xlu0 %v835
  %v892 = vpop.xlane.xlu0 %891
  %893 = vadd.xlane.f32.xlu0 %v836
  %v894 = vpop.xlane.xlu0 %893
  %895 = vadd.xlane.f32.xlu0 %v837
  %v896 = vpop.xlane.xlu0 %895
  %897 = vadd.xlane.f32.xlu0 %v838
  %v898 = vpop.xlane.xlu0 %897
  %899 = vadd.xlane.f32.xlu0 %v839
  %v900 = vpop.xlane.xlu0 %899
  %901 = vadd.xlane.f32.xlu0 %v840
  %v902 = vpop.xlane.xlu0 %901
  %903 = vadd.xlane.f32.xlu0 %v841
  %v904 = vpop.xlane.xlu0 %903
  %905 = vadd.xlane.f32.xlu0 %v842
  %v906 = vpop.xlane.xlu0 %905
  %v907 = vmul.f32 %v844, 0.015625
  %v908 = vmul.f32 %v846, 0.015625
  %v909 = vmul.f32 %v848, 0.015625
  %v910 = vmul.f32 %v850, 0.015625
  %v911 = vmul.f32 %v852, 0.015625
  %v912 = vmul.f32 %v854, 0.015625
  %v913 = vmul.f32 %v856, 0.015625
  %v914 = vmul.f32 %v858, 0.015625
  %v915 = vmul.f32 %v860, 0.015625
  %v916 = vmul.f32 %v862, 0.015625
  %v917 = vmul.f32 %v864, 0.015625
  %v918 = vmul.f32 %v866, 0.015625
  %v919 = vmul.f32 %v868, 0.015625
  %v920 = vmul.f32 %v870, 0.015625
  %v921 = vmul.f32 %v872, 0.015625
  %v922 = vmul.f32 %v874, 0.015625
  %v923 = vmul.f32 %v876, 0.015625
  %v924 = vmul.f32 %v878, 0.015625
  %v925 = vmul.f32 %v880, 0.015625
  %v926 = vmul.f32 %v882, 0.015625
  %v927 = vmul.f32 %v884, 0.015625
  %v928 = vmul.f32 %v886, 0.015625
  %v929 = vmul.f32 %v888, 0.015625
  %v930 = vmul.f32 %v890, 0.015625
  %v931 = vmul.f32 %v892, 0.015625
  %v932 = vmul.f32 %v894, 0.015625
  %v933 = vmul.f32 %v896, 0.015625
  %v934 = vmul.f32 %v898, 0.015625
  %v935 = vmul.f32 %v900, 0.015625
  %v936 = vmul.f32 %v902, 0.015625
  %v937 = vmul.f32 %v904, 0.015625
  %v938 = vmul.f32 %v906, 0.015625
  %v939 = vadd.f32 %v907, 1e-05
  %v940 = vadd.f32 %v908, 1e-05
  %v941 = vadd.f32 %v909, 1e-05
  %v942 = vadd.f32 %v910, 1e-05
  %v943 = vadd.f32 %v911, 1e-05
  %v944 = vadd.f32 %v912, 1e-05
  %v945 = vadd.f32 %v913, 1e-05
  %v946 = vadd.f32 %v914, 1e-05
  %v947 = vadd.f32 %v915, 1e-05
  %v948 = vadd.f32 %v916, 1e-05
  %v949 = vadd.f32 %v917, 1e-05
  %v950 = vadd.f32 %v918, 1e-05
  %v951 = vadd.f32 %v919, 1e-05
  %v952 = vadd.f32 %v920, 1e-05
  %v953 = vadd.f32 %v921, 1e-05
  %v954 = vadd.f32 %v922, 1e-05
  %v955 = vadd.f32 %v923, 1e-05
  %v956 = vadd.f32 %v924, 1e-05
  %v957 = vadd.f32 %v925, 1e-05
  %v958 = vadd.f32 %v926, 1e-05
  %v959 = vadd.f32 %v927, 1e-05
  %v960 = vadd.f32 %v928, 1e-05
  %v961 = vadd.f32 %v929, 1e-05
  %v962 = vadd.f32 %v930, 1e-05
  %v963 = vadd.f32 %v931, 1e-05
  %v964 = vadd.f32 %v932, 1e-05
  %v965 = vadd.f32 %v933, 1e-05
  %v966 = vadd.f32 %v934, 1e-05
  %v967 = vadd.f32 %v935, 1e-05
  %v968 = vadd.f32 %v936, 1e-05
  %v969 = vadd.f32 %v937, 1e-05
  %v970 = vadd.f32 %v938, 1e-05
  %v971 = vrsqrt.pop %v939
  %v972 = vrsqrt.pop %v940
  %v973 = vrsqrt.pop %v941
  %v974 = vrsqrt.pop %v942
  %v975 = vrsqrt.pop %v943
  %v976 = vrsqrt.pop %v944
  %v977 = vrsqrt.pop %v945
  %v978 = vrsqrt.pop %v946
  %v979 = vrsqrt.pop %v947
  %v980 = vrsqrt.pop %v948
  %v981 = vrsqrt.pop %v949
  %v982 = vrsqrt.pop %v950
  %v983 = vrsqrt.pop %v951
  %v984 = vrsqrt.pop %v952
  %v985 = vrsqrt.pop %v953
  %v986 = vrsqrt.pop %v954
  %v987 = vrsqrt.pop %v955
  %v988 = vrsqrt.pop %v956
  %v989 = vrsqrt.pop %v957
  %v990 = vrsqrt.pop %v958
  %v991 = vrsqrt.pop %v959
  %v992 = vrsqrt.pop %v960
  %v993 = vrsqrt.pop %v961
  %v994 = vrsqrt.pop %v962
  %v995 = vrsqrt.pop %v963
  %v996 = vrsqrt.pop %v964
  %v997 = vrsqrt.pop %v965
  %v998 = vrsqrt.pop %v966
  %v999 = vrsqrt.pop %v967
  %v1000 = vrsqrt.pop %v968
  %v1001 = vrsqrt.pop %v969
  %v1002 = vrsqrt.pop %v970
  %v1003 = vmul.f32 %v779, %v971
  %v1004 = vmul.f32 %v780, %v972
  %v1005 = vmul.f32 %v781, %v973
  %v1006 = vmul.f32 %v782, %v974
  %v1007 = vmul.f32 %v783, %v975
  %v1008 = vmul.f32 %v784, %v976
  %v1009 = vmul.f32 %v785, %v977
  %v1010 = vmul.f32 %v786, %v978
  %v1011 = vmul.f32 %v787, %v979
  %v1012 = vmul.f32 %v788, %v980
  %v1013 = vmul.f32 %v789, %v981
  %v1014 = vmul.f32 %v790, %v982
  %v1015 = vmul.f32 %v791, %v983
  %v1016 = vmul.f32 %v792, %v984
  %v1017 = vmul.f32 %v793, %v985
  %v1018 = vmul.f32 %v794, %v986
  %v1019 = vmul.f32 %v795, %v987
  %v1020 = vmul.f32 %v796, %v988
  %v1021 = vmul.f32 %v797, %v989
  %v1022 = vmul.f32 %v798, %v990
  %v1023 = vmul.f32 %v799, %v991
  %v1024 = vmul.f32 %v800, %v992
  %v1025 = vmul.f32 %v801, %v993
  %v1026 = vmul.f32 %v802, %v994
  %v1027 = vmul.f32 %v803, %v995
  %v1028 = vmul.f32 %v804, %v996
  %v1029 = vmul.f32 %v805, %v997
  %v1030 = vmul.f32 %v806, %v998
  %v1031 = vmul.f32 %v807, %v999
  %v1032 = vmul.f32 %v808, %v1000
  %v1033 = vmul.f32 %v809, %v1001
  %v1034 = vmul.f32 %v810, %v1002
  %v1035 = vlaneseq
  %v1036 = vshrl.u32 %v1035, 7
  %v1037 = vsub.s32 0, %v1036
  %v1038 = vrot.slane %v647, %v1037
  %v1039 = vmul.f32 %v1003, %v1038
  %v1040 = vmul.f32 %v1004, %v1038
  %v1041 = vmul.f32 %v1005, %v1038
  %v1042 = vmul.f32 %v1006, %v1038
  %v1043 = vmul.f32 %v1007, %v1038
  %v1044 = vmul.f32 %v1008, %v1038
  %v1045 = vmul.f32 %v1009, %v1038
  %v1046 = vmul.f32 %v1010, %v1038
  %v1047 = vmul.f32 %v1011, %v1038
  %v1048 = vmul.f32 %v1012, %v1038
  %v1049 = vmul.f32 %v1013, %v1038
  %v1050 = vmul.f32 %v1014, %v1038
  %v1051 = vmul.f32 %v1015, %v1038
  %v1052 = vmul.f32 %v1016, %v1038
  %v1053 = vmul.f32 %v1017, %v1038
  %v1054 = vmul.f32 %v1018, %v1038
  %v1055 = vmul.f32 %v1019, %v1038
  %v1056 = vmul.f32 %v1020, %v1038
  %v1057 = vmul.f32 %v1021, %v1038
  %v1058 = vmul.f32 %v1022, %v1038
  %v1059 = vmul.f32 %v1023, %v1038
  %v1060 = vmul.f32 %v1024, %v1038
  %v1061 = vmul.f32 %v1025, %v1038
  %v1062 = vmul.f32 %v1026, %v1038
  %v1063 = vmul.f32 %v1027, %v1038
  %v1064 = vmul.f32 %v1028, %v1038
  %v1065 = vmul.f32 %v1029, %v1038
  %v1066 = vmul.f32 %v1030, %v1038
  %v1067 = vmul.f32 %v1031, %v1038
  %v1068 = vmul.f32 %v1032, %v1038
  %v1069 = vmul.f32 %v1033, %v1038
  %v1070 = vmul.f32 %v1034, %v1038
  %v1071 = vlaneseq
  %v1072 = vshrl.u32 %v1071, 7
  %v1073 = vsub.s32 0, %v1072
  %v1074 = vrot.slane %v648, %v1073
  %v1075 = vadd.f32 %v1039, %v1074
  %v1076 = vadd.f32 %v1040, %v1074
  %v1077 = vadd.f32 %v1041, %v1074
  %v1078 = vadd.f32 %v1042, %v1074
  %v1079 = vadd.f32 %v1043, %v1074
  %v1080 = vadd.f32 %v1044, %v1074
  %v1081 = vadd.f32 %v1045, %v1074
  %v1082 = vadd.f32 %v1046, %v1074
  %v1083 = vadd.f32 %v1047, %v1074
  %v1084 = vadd.f32 %v1048, %v1074
  %v1085 = vadd.f32 %v1049, %v1074
  %v1086 = vadd.f32 %v1050, %v1074
  %v1087 = vadd.f32 %v1051, %v1074
  %v1088 = vadd.f32 %v1052, %v1074
  %v1089 = vadd.f32 %v1053, %v1074
  %v1090 = vadd.f32 %v1054, %v1074
  %v1091 = vadd.f32 %v1055, %v1074
  %v1092 = vadd.f32 %v1056, %v1074
  %v1093 = vadd.f32 %v1057, %v1074
  %v1094 = vadd.f32 %v1058, %v1074
  %v1095 = vadd.f32 %v1059, %v1074
  %v1096 = vadd.f32 %v1060, %v1074
  %v1097 = vadd.f32 %v1061, %v1074
  %v1098 = vadd.f32 %v1062, %v1074
  %v1099 = vadd.f32 %v1063, %v1074
  %v1100 = vadd.f32 %v1064, %v1074
  %v1101 = vadd.f32 %v1065, %v1074
  %v1102 = vadd.f32 %v1066, %v1074
  %v1103 = vadd.f32 %v1067, %v1074
  %v1104 = vadd.f32 %v1068, %v1074
  %v1105 = vadd.f32 %v1069, %v1074
  %v1106 = vadd.f32 %v1070, %v1074
  %v1107 = vmax.f32 %v1075, 0.0
  %v1108 = vmax.f32 %v1076, 0.0
  %v1109 = vmax.f32 %v1077, 0.0
  %v1110 = vmax.f32 %v1078, 0.0
  %v1111 = vmax.f32 %v1079, 0.0
  %v1112 = vmax.f32 %v1080, 0.0
  %v1113 = vmax.f32 %v1081, 0.0
  %v1114 = vmax.f32 %v1082, 0.0
  %v1115 = vmax.f32 %v1083, 0.0
  %v1116 = vmax.f32 %v1084, 0.0
  %v1117 = vmax.f32 %v1085, 0.0
  %v1118 = vmax.f32 %v1086, 0.0
  %v1119 = vmax.f32 %v1087, 0.0
  %v1120 = vmax.f32 %v1088, 0.0
  %v1121 = vmax.f32 %v1089, 0.0
  %v1122 = vmax.f32 %v1090, 0.0
  %v1123 = vmax.f32 %v1091, 0.0
  %v1124 = vmax.f32 %v1092, 0.0
  %v1125 = vmax.f32 %v1093, 0.0
  %v1126 = vmax.f32 %v1094, 0.0
  %v1127 = vmax.f32 %v1095, 0.0
  %v1128 = vmax.f32 %v1096, 0.0
  %v1129 = vmax.f32 %v1097, 0.0
  %v1130 = vmax.f32 %v1098, 0.0
  %v1131 = vmax.f32 %v1099, 0.0
  %v1132 = vmax.f32 %v1100, 0.0
  %v1133 = vmax.f32 %v1101, 0.0
  %v1134 = vmax.f32 %v1102, 0.0
  %v1135 = vmax.f32 %v1103, 0.0
  %v1136 = vmax.f32 %v1104, 0.0
  %v1137 = vmax.f32 %v1105, 0.0
  %v1138 = vmax.f32 %v1106, 0.0
  %v1139 = vld [vmem:[%s3] sm:$0xff]
  %v1140 = vld [vmem:[%s3 + $0x8] sm:$0xff]
  %v1141 = vld [vmem:[%s3 + $0x10] sm:$0xff]
  %v1142 = vld [vmem:[%s3 + $0x18] sm:$0xff]
  %v1143 = vld [vmem:[%s3 + $0x20] sm:$0xff]
  %v1144 = vld [vmem:[%s3 + $0x28] sm:$0xff]
  %v1145 = vld [vmem:[%s3 + $0x30] sm:$0xff]
  %v1146 = vld [vmem:[%s3 + $0x38] sm:$0xff]
  %v1147 = vld [vmem:[%s3 + $0x40] sm:$0xff]
  %v1148 = vld [vmem:[%s3 + $0x48] sm:$0xff]
  %v1149 = vld [vmem:[%s3 + $0x50] sm:$0xff]
  %v1150 = vld [vmem:[%s3 + $0x58] sm:$0xff]
  %v1151 = vld [vmem:[%s3 + $0x60] sm:$0xff]
  %v1152 = vld [vmem:[%s3 + $0x68] sm:$0xff]
  %v1153 = vld [vmem:[%s3 + $0x70] sm:$0xff]
  %v1154 = vld [vmem:[%s3 + $0x78] sm:$0xff]
  %v1155 = vld [vmem:[%s4 + $0x4] sm:$0x1]
  %v1156 = vlaneseq
  %v1157 = vshrl.u32 %v1156, 7
  %v1158 = vsub.s32 0, %v1157
  %v1159 = vrot.slane %v1155, %v1158
  %1160 = vmatprep.subr.mxu0 0.0
  %1161 = vmatpush1.msra.mxu0 %v1154
  %1162 = vmatprep.subr.mxu0 0.0
  %1163 = vmatpush1.msra.mxu0 %v1153
  %1164 = vmatprep.subr.mxu0 0.0
  %1165 = vmatpush1.msra.mxu0 %v1152
  %1166 = vmatprep.subr.mxu0 0.0
  %1167 = vmatpush1.msra.mxu0 %v1151
  %1168 = vmatprep.subr.mxu0 0.0
  %1169 = vmatpush1.msra.mxu0 %v1150
  %1170 = vmatprep.subr.mxu0 0.0
  %1171 = vmatpush1.msra.mxu0 %v1149
  %1172 = vmatprep.subr.mxu0 0.0
  %1173 = vmatpush1.msra.mxu0 %v1148
  %1174 = vmatprep.subr.mxu0 0.0
  %1175 = vmatpush1.msra.mxu0 %v1147
  %1176 = vmatprep.subr.mxu0 0.0
  %1177 = vmatpush1.msra.mxu0 %v1146
  %1178 = vmatprep.subr.mxu0 0.0
  %1179 = vmatpush1.msra.mxu0 %v1145
  %1180 = vmatprep.subr.mxu0 0.0
  %1181 = vmatpush1.msra.mxu0 %v1144
  %1182 = vmatprep.subr.mxu0 0.0
  %1183 = vmatpush1.msra.mxu0 %v1143
  %1184 = vmatprep.subr.mxu0 0.0
  %1185 = vmatpush1.msra.mxu0 %v1142
  %1186 = vmatprep.subr.mxu0 0.0
  %1187 = vmatpush1.msra.mxu0 %v1141
  %1188 = vmatprep.subr.mxu0 0.0
  %1189 = vmatpush1.msra.mxu0 %v1140
  %1190 = vmatprep.subr.mxu0 0.0
  %1191 = vmatpush1.msra.mxu0 %v1139
  %1192 = vmatprep.subr.mxu0 0.0
  %1193 = vmatpush2.msra.mxu0 0.0
  %1194 = vmatprep.subr.mxu0 0.0
  %1195 = vmatpush2.msra.mxu0 0.0
  %1196 = vmatprep.subr.mxu0 0.0
  %1197 = vmatpush2.msra.mxu0 0.0
  %1198 = vmatprep.subr.mxu0 0.0
  %1199 = vmatpush2.msra.mxu0 0.0
  %1200 = vmatprep.subr.mxu0 0.0
  %1201 = vmatpush2.msra.mxu0 0.0
  %1202 = vmatprep.subr.mxu0 0.0
  %1203 = vmatpush2.msra.mxu0 0.0
  %1204 = vmatprep.subr.mxu0 0.0
  %1205 = vmatpush2.msra.mxu0 0.0
  %1206 = vmatprep.subr.mxu0 0.0
  %1207 = vmatpush2.msra.mxu0 0.0
  %1208 = vmatprep.subr.mxu0 0.0
  %1209 = vmatpush2.msra.mxu0 0.0
  %1210 = vmatprep.subr.mxu0 0.0
  %1211 = vmatpush2.msra.mxu0 0.0
  %1212 = vmatprep.subr.mxu0 0.0
  %1213 = vmatpush2.msra.mxu0 0.0
  %1214 = vmatprep.subr.mxu0 0.0
  %1215 = vmatpush2.msra.mxu0 0.0
  %1216 = vmatprep.subr.mxu0 0.0
  %1217 = vmatpush2.msra.mxu0 0.0
  %1218 = vmatprep.subr.mxu0 0.0
  %1219 = vmatpush2.msra.mxu0 0.0
  %1220 = vmatprep.subr.mxu0 0.0
  %1221 = vmatpush2.msra.mxu0 0.0
  %1222 = vmatprep.subr.mxu0 0.0
  %1223 = vmatpush2.msra.mxu0 0.0
  %1224 = vmatprep.mubr.f32.mxu0 0.0
  %1225 = vmatmul.mubr.f32.gmra.mxu0 %v1107
  %v1226 = vpop.f32.mrf.mxu0
  %v1227 = vadd.f32 %v1159, %v1226
  %v1228 = vpop.f32.mrf.mxu0
  %1229 = vmatprep.mubr.f32.mxu0 0.0
  %1230 = vmatmul.mubr.f32.gmra.mxu0 %v1108
  %v1231 = vpop.f32.mrf.mxu0
  %v1232 = vadd.f32 %v1159, %v1231
  %v1233 = vpop.f32.mrf.mxu0
  %1234 = vmatprep.mubr.f32.mxu0 0.0
  %1235 = vmatmul.mubr.f32.gmra.mxu0 %v1109
  %v1236 = vpop.f32.mrf.mxu0
  %v1237 = vadd.f32 %v1159, %v1236
  %v1238 = vpop.f32.mrf.mxu0
  %1239 = vmatprep.mubr.f32.mxu0 0.0
  %1240 = vmatmul.mubr.f32.gmra.mxu0 %v1110
  %v1241 = vpop.f32.mrf.mxu0
  %v1242 = vadd.f32 %v1159, %v1241
  %v1243 = vpop.f32.mrf.mxu0
  %1244 = vmatprep.mubr.f32.mxu0 0.0
  %1245 = vmatmul.mubr.f32.gmra.mxu0 %v1111
  %v1246 = vpop.f32.mrf.mxu0
  %v1247 = vadd.f32 %v1159, %v1246
  %v1248 = vpop.f32.mrf.mxu0
  %1249 = vmatprep.mubr.f32.mxu0 0.0
  %1250 = vmatmul.mubr.f32.gmra.mxu0 %v1112
  %v1251 = vpop.f32.mrf.mxu0
  %v1252 = vadd.f32 %v1159, %v1251
  %v1253 = vpop.f32.mrf.mxu0
  %1254 = vmatprep.mubr.f32.mxu0 0.0
  %1255 = vmatmul.mubr.f32.gmra.mxu0 %v1113
  %v1256 = vpop.f32.mrf.mxu0
  %v1257 = vadd.f32 %v1159, %v1256
  %v1258 = vpop.f32.mrf.mxu0
  %1259 = vmatprep.mubr.f32.mxu0 0.0
  %1260 = vmatmul.mubr.f32.gmra.mxu0 %v1114
  %v1261 = vpop.f32.mrf.mxu0
  %v1262 = vadd.f32 %v1159, %v1261
  %v1263 = vpop.f32.mrf.mxu0
  %1264 = vmatprep.mubr.f32.mxu0 0.0
  %1265 = vmatmul.mubr.f32.gmra.mxu0 %v1115
  %v1266 = vpop.f32.mrf.mxu0
  %v1267 = vadd.f32 %v1159, %v1266
  %v1268 = vpop.f32.mrf.mxu0
  %1269 = vmatprep.mubr.f32.mxu0 0.0
  %1270 = vmatmul.mubr.f32.gmra.mxu0 %v1116
  %v1271 = vpop.f32.mrf.mxu0
  %v1272 = vadd.f32 %v1159, %v1271
  %v1273 = vpop.f32.mrf.mxu0
  %1274 = vmatprep.mubr.f32.mxu0 0.0
  %1275 = vmatmul.mubr.f32.gmra.mxu0 %v1117
  %v1276 = vpop.f32.mrf.mxu0
  %v1277 = vadd.f32 %v1159, %v1276
  %v1278 = vpop.f32.mrf.mxu0
  %1279 = vmatprep.mubr.f32.mxu0 0.0
  %1280 = vmatmul.mubr.f32.gmra.mxu0 %v1118
  %v1281 = vpop.f32.mrf.mxu0
  %v1282 = vadd.f32 %v1159, %v1281
  %v1283 = vpop.f32.mrf.mxu0
  %1284 = vmatprep.mubr.f32.mxu0 0.0
  %1285 = vmatmul.mubr.f32.gmra.mxu0 %v1119
  %v1286 = vpop.f32.mrf.mxu0
  %v1287 = vadd.f32 %v1159, %v1286
  %v1288 = vpop.f32.mrf.mxu0
  %1289 = vmatprep.mubr.f32.mxu0 0.0
  %1290 = vmatmul.mubr.f32.gmra.mxu0 %v1120
  %v1291 = vpop.f32.mrf.mxu0
  %v1292 = vadd.f32 %v1159, %v1291
  %v1293 = vpop.f32.mrf.mxu0
  %1294 = vmatprep.mubr.f32.mxu0 0.0
  %1295 = vmatmul.mubr.f32.gmra.mxu0 %v1121
  %v1296 = vpop.f32.mrf.mxu0
  %v1297 = vadd.f32 %v1159, %v1296
  %v1298 = vpop.f32.mrf.mxu0
  %1299 = vmatprep.mubr.f32.mxu0 0.0
  %1300 = vmatmul.mubr.f32.gmra.mxu0 %v1122
  %v1301 = vpop.f32.mrf.mxu0
  %v1302 = vadd.f32 %v1159, %v1301
  %v1303 = vpop.f32.mrf.mxu0
  %1304 = vmatprep.mubr.f32.mxu0 0.0
  %1305 = vmatmul.mubr.f32.gmra.mxu0 %v1123
  %v1306 = vpop.f32.mrf.mxu0
  %v1307 = vadd.f32 %v1159, %v1306
  %v1308 = vpop.f32.mrf.mxu0
  %1309 = vmatprep.mubr.f32.mxu0 0.0
  %1310 = vmatmul.mubr.f32.gmra.mxu0 %v1124
  %v1311 = vpop.f32.mrf.mxu0
  %v1312 = vadd.f32 %v1159, %v1311
  %v1313 = vpop.f32.mrf.mxu0
  %1314 = vmatprep.mubr.f32.mxu0 0.0
  %1315 = vmatmul.mubr.f32.gmra.mxu0 %v1125
  %v1316 = vpop.f32.mrf.mxu0
  %v1317 = vadd.f32 %v1159, %v1316
  %v1318 = vpop.f32.mrf.mxu0
  %1319 = vmatprep.mubr.f32.mxu0 0.0
  %1320 = vmatmul.mubr.f32.gmra.mxu0 %v1126
  %v1321 = vpop.f32.mrf.mxu0
  %v1322 = vadd.f32 %v1159, %v1321
  %v1323 = vpop.f32.mrf.mxu0
  %1324 = vmatprep.mubr.f32.mxu0 0.0
  %1325 = vmatmul.mubr.f32.gmra.mxu0 %v1127
  %v1326 = vpop.f32.mrf.mxu0
  %v1327 = vadd.f32 %v1159, %v1326
  %v1328 = vpop.f32.mrf.mxu0
  %1329 = vmatprep.mubr.f32.mxu0 0.0
  %1330 = vmatmul.mubr.f32.gmra.mxu0 %v1128
  %v1331 = vpop.f32.mrf.mxu0
  %v1332 = vadd.f32 %v1159, %v1331
  %v1333 = vpop.f32.mrf.mxu0
  %1334 = vmatprep.mubr.f32.mxu0 0.0
  %1335 = vmatmul.mubr.f32.gmra.mxu0 %v1129
  %v1336 = vpop.f32.mrf.mxu0
  %v1337 = vadd.f32 %v1159, %v1336
  %v1338 = vpop.f32.mrf.mxu0
  %1339 = vmatprep.mubr.f32.mxu0 0.0
  %1340 = vmatmul.mubr.f32.gmra.mxu0 %v1130
  %v1341 = vpop.f32.mrf.mxu0
  %v1342 = vadd.f32 %v1159, %v1341
  %v1343 = vpop.f32.mrf.mxu0
  %1344 = vmatprep.mubr.f32.mxu0 0.0
  %1345 = vmatmul.mubr.f32.gmra.mxu0 %v1131
  %v1346 = vpop.f32.mrf.mxu0
  %v1347 = vadd.f32 %v1159, %v1346
  %v1348 = vpop.f32.mrf.mxu0
  %1349 = vmatprep.mubr.f32.mxu0 0.0
  %1350 = vmatmul.mubr.f32.gmra.mxu0 %v1132
  %v1351 = vpop.f32.mrf.mxu0
  %v1352 = vadd.f32 %v1159, %v1351
  %v1353 = vpop.f32.mrf.mxu0
  %1354 = vmatprep.mubr.f32.mxu0 0.0
  %1355 = vmatmul.mubr.f32.gmra.mxu0 %v1133
  %v1356 = vpop.f32.mrf.mxu0
  %v1357 = vadd.f32 %v1159, %v1356
  %v1358 = vpop.f32.mrf.mxu0
  %1359 = vmatprep.mubr.f32.mxu0 0.0
  %1360 = vmatmul.mubr.f32.gmra.mxu0 %v1134
  %v1361 = vpop.f32.mrf.mxu0
  %v1362 = vadd.f32 %v1159, %v1361
  %v1363 = vpop.f32.mrf.mxu0
  %1364 = vmatprep.mubr.f32.mxu0 0.0
  %1365 = vmatmul.mubr.f32.gmra.mxu0 %v1135
  %v1366 = vpop.f32.mrf.mxu0
  %v1367 = vadd.f32 %v1159, %v1366
  %v1368 = vpop.f32.mrf.mxu0
  %1369 = vmatprep.mubr.f32.mxu0 0.0
  %1370 = vmatmul.mubr.f32.gmra.mxu0 %v1136
  %v1371 = vpop.f32.mrf.mxu0
  %v1372 = vadd.f32 %v1159, %v1371
  %v1373 = vpop.f32.mrf.mxu0
  %1374 = vmatprep.mubr.f32.mxu0 0.0
  %1375 = vmatmul.mubr.f32.gmra.mxu0 %v1137
  %v1376 = vpop.f32.mrf.mxu0
  %v1377 = vadd.f32 %v1159, %v1376
  %v1378 = vpop.f32.mrf.mxu0
  %1379 = vmatprep.mubr.f32.mxu0 0.0
  %1380 = vmatmul.mubr.f32.gmra.mxu0 %v1138
  %v1381 = vpop.f32.mrf.mxu0
  %v1382 = vadd.f32 %v1159, %v1381
  %v1383 = vpop.f32.mrf.mxu0
  %1384 = vdwg.mxu0
  %v1385 = vld [vmem:[%s4 + $0x5] sm:$0x1]
  %v1386 = vld [vmem:[%s4 + $0x6] sm:$0x1]
  %1387 = vadd.xlane.f32.xlu0 %v1227
  %v1388 = vpop.xlane.xlu0 %1387
  %1389 = vadd.xlane.f32.xlu0 %v1232
  %v1390 = vpop.xlane.xlu0 %1389
  %1391 = vadd.xlane.f32.xlu0 %v1237
  %v1392 = vpop.xlane.xlu0 %1391
  %1393 = vadd.xlane.f32.xlu0 %v1242
  %v1394 = vpop.xlane.xlu0 %1393
  %1395 = vadd.xlane.f32.xlu0 %v1247
  %v1396 = vpop.xlane.xlu0 %1395
  %1397 = vadd.xlane.f32.xlu0 %v1252
  %v1398 = vpop.xlane.xlu0 %1397
  %1399 = vadd.xlane.f32.xlu0 %v1257
  %v1400 = vpop.xlane.xlu0 %1399
  %1401 = vadd.xlane.f32.xlu0 %v1262
  %v1402 = vpop.xlane.xlu0 %1401
  %1403 = vadd.xlane.f32.xlu0 %v1267
  %v1404 = vpop.xlane.xlu0 %1403
  %1405 = vadd.xlane.f32.xlu0 %v1272
  %v1406 = vpop.xlane.xlu0 %1405
  %1407 = vadd.xlane.f32.xlu0 %v1277
  %v1408 = vpop.xlane.xlu0 %1407
  %1409 = vadd.xlane.f32.xlu0 %v1282
  %v1410 = vpop.xlane.xlu0 %1409
  %1411 = vadd.xlane.f32.xlu0 %v1287
  %v1412 = vpop.xlane.xlu0 %1411
  %1413 = vadd.xlane.f32.xlu0 %v1292
  %v1414 = vpop.xlane.xlu0 %1413
  %1415 = vadd.xlane.f32.xlu0 %v1297
  %v1416 = vpop.xlane.xlu0 %1415
  %1417 = vadd.xlane.f32.xlu0 %v1302
  %v1418 = vpop.xlane.xlu0 %1417
  %1419 = vadd.xlane.f32.xlu0 %v1307
  %v1420 = vpop.xlane.xlu0 %1419
  %1421 = vadd.xlane.f32.xlu0 %v1312
  %v1422 = vpop.xlane.xlu0 %1421
  %1423 = vadd.xlane.f32.xlu0 %v1317
  %v1424 = vpop.xlane.xlu0 %1423
  %1425 = vadd.xlane.f32.xlu0 %v1322
  %v1426 = vpop.xlane.xlu0 %1425
  %1427 = vadd.xlane.f32.xlu0 %v1327
  %v1428 = vpop.xlane.xlu0 %1427
  %1429 = vadd.xlane.f32.xlu0 %v1332
  %v1430 = vpop.xlane.xlu0 %1429
  %1431 = vadd.xlane.f32.xlu0 %v1337
  %v1432 = vpop.xlane.xlu0 %1431
  %1433 = vadd.xlane.f32.xlu0 %v1342
  %v1434 = vpop.xlane.xlu0 %1433
  %1435 = vadd.xlane.f32.xlu0 %v1347
  %v1436 = vpop.xlane.xlu0 %1435
  %1437 = vadd.xlane.f32.xlu0 %v1352
  %v1438 = vpop.xlane.xlu0 %1437
  %1439 = vadd.xlane.f32.xlu0 %v1357
  %v1440 = vpop.xlane.xlu0 %1439
  %1441 = vadd.xlane.f32.xlu0 %v1362
  %v1442 = vpop.xlane.xlu0 %1441
  %1443 = vadd.xlane.f32.xlu0 %v1367
  %v1444 = vpop.xlane.xlu0 %1443
  %1445 = vadd.xlane.f32.xlu0 %v1372
  %v1446 = vpop.xlane.xlu0 %1445
  %1447 = vadd.xlane.f32.xlu0 %v1377
  %v1448 = vpop.xlane.xlu0 %1447
  %1449 = vadd.xlane.f32.xlu0 %v1382
  %v1450 = vpop.xlane.xlu0 %1449
  %v1451 = vmul.f32 %v1388, 0.015625
  %v1452 = vmul.f32 %v1390, 0.015625
  %v1453 = vmul.f32 %v1392, 0.015625
  %v1454 = vmul.f32 %v1394, 0.015625
  %v1455 = vmul.f32 %v1396, 0.015625
  %v1456 = vmul.f32 %v1398, 0.015625
  %v1457 = vmul.f32 %v1400, 0.015625
  %v1458 = vmul.f32 %v1402, 0.015625
  %v1459 = vmul.f32 %v1404, 0.015625
  %v1460 = vmul.f32 %v1406, 0.015625
  %v1461 = vmul.f32 %v1408, 0.015625
  %v1462 = vmul.f32 %v1410, 0.015625
  %v1463 = vmul.f32 %v1412, 0.015625
  %v1464 = vmul.f32 %v1414, 0.015625
  %v1465 = vmul.f32 %v1416, 0.015625
  %v1466 = vmul.f32 %v1418, 0.015625
  %v1467 = vmul.f32 %v1420, 0.015625
  %v1468 = vmul.f32 %v1422, 0.015625
  %v1469 = vmul.f32 %v1424, 0.015625
  %v1470 = vmul.f32 %v1426, 0.015625
  %v1471 = vmul.f32 %v1428, 0.015625
  %v1472 = vmul.f32 %v1430, 0.015625
  %v1473 = vmul.f32 %v1432, 0.015625
  %v1474 = vmul.f32 %v1434, 0.015625
  %v1475 = vmul.f32 %v1436, 0.015625
  %v1476 = vmul.f32 %v1438, 0.015625
  %v1477 = vmul.f32 %v1440, 0.015625
  %v1478 = vmul.f32 %v1442, 0.015625
  %v1479 = vmul.f32 %v1444, 0.015625
  %v1480 = vmul.f32 %v1446, 0.015625
  %v1481 = vmul.f32 %v1448, 0.015625
  %v1482 = vmul.f32 %v1450, 0.015625
  %v1483 = vsub.f32 %v1227, %v1451
  %v1484 = vsub.f32 %v1232, %v1452
  %v1485 = vsub.f32 %v1237, %v1453
  %v1486 = vsub.f32 %v1242, %v1454
  %v1487 = vsub.f32 %v1247, %v1455
  %v1488 = vsub.f32 %v1252, %v1456
  %v1489 = vsub.f32 %v1257, %v1457
  %v1490 = vsub.f32 %v1262, %v1458
  %v1491 = vsub.f32 %v1267, %v1459
  %v1492 = vsub.f32 %v1272, %v1460
  %v1493 = vsub.f32 %v1277, %v1461
  %v1494 = vsub.f32 %v1282, %v1462
  %v1495 = vsub.f32 %v1287, %v1463
  %v1496 = vsub.f32 %v1292, %v1464
  %v1497 = vsub.f32 %v1297, %v1465
  %v1498 = vsub.f32 %v1302, %v1466
  %v1499 = vsub.f32 %v1307, %v1467
  %v1500 = vsub.f32 %v1312, %v1468
  %v1501 = vsub.f32 %v1317, %v1469
  %v1502 = vsub.f32 %v1322, %v1470
  %v1503 = vsub.f32 %v1327, %v1471
  %v1504 = vsub.f32 %v1332, %v1472
  %v1505 = vsub.f32 %v1337, %v1473
  %v1506 = vsub.f32 %v1342, %v1474
  %v1507 = vsub.f32 %v1347, %v1475
  %v1508 = vsub.f32 %v1352, %v1476
  %v1509 = vsub.f32 %v1357, %v1477
  %v1510 = vsub.f32 %v1362, %v1478
  %v1511 = vsub.f32 %v1367, %v1479
  %v1512 = vsub.f32 %v1372, %v1480
  %v1513 = vsub.f32 %v1377, %v1481
  %v1514 = vsub.f32 %v1382, %v1482
  %v1515 = vsel %vm778, %v1483, 0.0
  %v1516 = vsel %vm778, %v1484, 0.0
  %v1517 = vsel %vm778, %v1485, 0.0
  %v1518 = vsel %vm778, %v1486, 0.0
  %v1519 = vsel %vm778, %v1487, 0.0
  %v1520 = vsel %vm778, %v1488, 0.0
  %v1521 = vsel %vm778, %v1489, 0.0
  %v1522 = vsel %vm778, %v1490, 0.0
  %v1523 = vsel %vm778, %v1491, 0.0
  %v1524 = vsel %vm778, %v1492, 0.0
  %v1525 = vsel %vm778, %v1493, 0.0
  %v1526 = vsel %vm778, %v1494, 0.0
  %v1527 = vsel %vm778, %v1495, 0.0
  %v1528 = vsel %vm778, %v1496, 0.0
  %v1529 = vsel %vm778, %v1497, 0.0
  %v1530 = vsel %vm778, %v1498, 0.0
  %v1531 = vsel %vm778, %v1499, 0.0
  %v1532 = vsel %vm778, %v1500, 0.0
  %v1533 = vsel %vm778, %v1501, 0.0
  %v1534 = vsel %vm778, %v1502, 0.0
  %v1535 = vsel %vm778, %v1503, 0.0
  %v1536 = vsel %vm778, %v1504, 0.0
  %v1537 = vsel %vm778, %v1505, 0.0
  %v1538 = vsel %vm778, %v1506, 0.0
  %v1539 = vsel %vm778, %v1507, 0.0
  %v1540 = vsel %vm778, %v1508, 0.0
  %v1541 = vsel %vm778, %v1509, 0.0
  %v1542 = vsel %vm778, %v1510, 0.0
  %v1543 = vsel %vm778, %v1511, 0.0
  %v1544 = vsel %vm778, %v1512, 0.0
  %v1545 = vsel %vm778, %v1513, 0.0
  %v1546 = vsel %vm778, %v1514, 0.0
  %v1547 = vmul.f32 %v1515, %v1515
  %v1548 = vmul.f32 %v1516, %v1516
  %v1549 = vmul.f32 %v1517, %v1517
  %v1550 = vmul.f32 %v1518, %v1518
  %v1551 = vmul.f32 %v1519, %v1519
  %v1552 = vmul.f32 %v1520, %v1520
  %v1553 = vmul.f32 %v1521, %v1521
  %v1554 = vmul.f32 %v1522, %v1522
  %v1555 = vmul.f32 %v1523, %v1523
  %v1556 = vmul.f32 %v1524, %v1524
  %v1557 = vmul.f32 %v1525, %v1525
  %v1558 = vmul.f32 %v1526, %v1526
  %v1559 = vmul.f32 %v1527, %v1527
  %v1560 = vmul.f32 %v1528, %v1528
  %v1561 = vmul.f32 %v1529, %v1529
  %v1562 = vmul.f32 %v1530, %v1530
  %v1563 = vmul.f32 %v1531, %v1531
  %v1564 = vmul.f32 %v1532, %v1532
  %v1565 = vmul.f32 %v1533, %v1533
  %v1566 = vmul.f32 %v1534, %v1534
  %v1567 = vmul.f32 %v1535, %v1535
  %v1568 = vmul.f32 %v1536, %v1536
  %v1569 = vmul.f32 %v1537, %v1537
  %v1570 = vmul.f32 %v1538, %v1538
  %v1571 = vmul.f32 %v1539, %v1539
  %v1572 = vmul.f32 %v1540, %v1540
  %v1573 = vmul.f32 %v1541, %v1541
  %v1574 = vmul.f32 %v1542, %v1542
  %v1575 = vmul.f32 %v1543, %v1543
  %v1576 = vmul.f32 %v1544, %v1544
  %v1577 = vmul.f32 %v1545, %v1545
  %v1578 = vmul.f32 %v1546, %v1546
  %1579 = vadd.xlane.f32.xlu0 %v1547
  %v1580 = vpop.xlane.xlu0 %1579
  %1581 = vadd.xlane.f32.xlu0 %v1548
  %v1582 = vpop.xlane.xlu0 %1581
  %1583 = vadd.xlane.f32.xlu0 %v1549
  %v1584 = vpop.xlane.xlu0 %1583
  %1585 = vadd.xlane.f32.xlu0 %v1550
  %v1586 = vpop.xlane.xlu0 %1585
  %1587 = vadd.xlane.f32.xlu0 %v1551
  %v1588 = vpop.xlane.xlu0 %1587
  %1589 = vadd.xlane.f32.xlu0 %v1552
  %v1590 = vpop.xlane.xlu0 %1589
  %1591 = vadd.xlane.f32.xlu0 %v1553
  %v1592 = vpop.xlane.xlu0 %1591
  %1593 = vadd.xlane.f32.xlu0 %v1554
  %v1594 = vpop.xlane.xlu0 %1593
  %1595 = vadd.xlane.f32.xlu0 %v1555
  %v1596 = vpop.xlane.xlu0 %1595
  %1597 = vadd.xlane.f32.xlu0 %v1556
  %v1598 = vpop.xlane.xlu0 %1597
  %1599 = vadd.xlane.f32.xlu0 %v1557
  %v1600 = vpop.xlane.xlu0 %1599
  %1601 = vadd.xlane.f32.xlu0 %v1558
  %v1602 = vpop.xlane.xlu0 %1601
  %1603 = vadd.xlane.f32.xlu0 %v1559
  %v1604 = vpop.xlane.xlu0 %1603
  %1605 = vadd.xlane.f32.xlu0 %v1560
  %v1606 = vpop.xlane.xlu0 %1605
  %1607 = vadd.xlane.f32.xlu0 %v1561
  %v1608 = vpop.xlane.xlu0 %1607
  %1609 = vadd.xlane.f32.xlu0 %v1562
  %v1610 = vpop.xlane.xlu0 %1609
  %1611 = vadd.xlane.f32.xlu0 %v1563
  %v1612 = vpop.xlane.xlu0 %1611
  %1613 = vadd.xlane.f32.xlu0 %v1564
  %v1614 = vpop.xlane.xlu0 %1613
  %1615 = vadd.xlane.f32.xlu0 %v1565
  %v1616 = vpop.xlane.xlu0 %1615
  %1617 = vadd.xlane.f32.xlu0 %v1566
  %v1618 = vpop.xlane.xlu0 %1617
  %1619 = vadd.xlane.f32.xlu0 %v1567
  %v1620 = vpop.xlane.xlu0 %1619
  %1621 = vadd.xlane.f32.xlu0 %v1568
  %v1622 = vpop.xlane.xlu0 %1621
  %1623 = vadd.xlane.f32.xlu0 %v1569
  %v1624 = vpop.xlane.xlu0 %1623
  %1625 = vadd.xlane.f32.xlu0 %v1570
  %v1626 = vpop.xlane.xlu0 %1625
  %1627 = vadd.xlane.f32.xlu0 %v1571
  %v1628 = vpop.xlane.xlu0 %1627
  %1629 = vadd.xlane.f32.xlu0 %v1572
  %v1630 = vpop.xlane.xlu0 %1629
  %1631 = vadd.xlane.f32.xlu0 %v1573
  %v1632 = vpop.xlane.xlu0 %1631
  %1633 = vadd.xlane.f32.xlu0 %v1574
  %v1634 = vpop.xlane.xlu0 %1633
  %1635 = vadd.xlane.f32.xlu0 %v1575
  %v1636 = vpop.xlane.xlu0 %1635
  %1637 = vadd.xlane.f32.xlu0 %v1576
  %v1638 = vpop.xlane.xlu0 %1637
  %1639 = vadd.xlane.f32.xlu0 %v1577
  %v1640 = vpop.xlane.xlu0 %1639
  %1641 = vadd.xlane.f32.xlu0 %v1578
  %v1642 = vpop.xlane.xlu0 %1641
  %v1643 = vmul.f32 %v1580, 0.015625
  %v1644 = vmul.f32 %v1582, 0.015625
  %v1645 = vmul.f32 %v1584, 0.015625
  %v1646 = vmul.f32 %v1586, 0.015625
  %v1647 = vmul.f32 %v1588, 0.015625
  %v1648 = vmul.f32 %v1590, 0.015625
  %v1649 = vmul.f32 %v1592, 0.015625
  %v1650 = vmul.f32 %v1594, 0.015625
  %v1651 = vmul.f32 %v1596, 0.015625
  %v1652 = vmul.f32 %v1598, 0.015625
  %v1653 = vmul.f32 %v1600, 0.015625
  %v1654 = vmul.f32 %v1602, 0.015625
  %v1655 = vmul.f32 %v1604, 0.015625
  %v1656 = vmul.f32 %v1606, 0.015625
  %v1657 = vmul.f32 %v1608, 0.015625
  %v1658 = vmul.f32 %v1610, 0.015625
  %v1659 = vmul.f32 %v1612, 0.015625
  %v1660 = vmul.f32 %v1614, 0.015625
  %v1661 = vmul.f32 %v1616, 0.015625
  %v1662 = vmul.f32 %v1618, 0.015625
  %v1663 = vmul.f32 %v1620, 0.015625
  %v1664 = vmul.f32 %v1622, 0.015625
  %v1665 = vmul.f32 %v1624, 0.015625
  %v1666 = vmul.f32 %v1626, 0.015625
  %v1667 = vmul.f32 %v1628, 0.015625
  %v1668 = vmul.f32 %v1630, 0.015625
  %v1669 = vmul.f32 %v1632, 0.015625
  %v1670 = vmul.f32 %v1634, 0.015625
  %v1671 = vmul.f32 %v1636, 0.015625
  %v1672 = vmul.f32 %v1638, 0.015625
  %v1673 = vmul.f32 %v1640, 0.015625
  %v1674 = vmul.f32 %v1642, 0.015625
  %v1675 = vadd.f32 %v1643, 1e-05
  %v1676 = vadd.f32 %v1644, 1e-05
  %v1677 = vadd.f32 %v1645, 1e-05
  %v1678 = vadd.f32 %v1646, 1e-05
  %v1679 = vadd.f32 %v1647, 1e-05
  %v1680 = vadd.f32 %v1648, 1e-05
  %v1681 = vadd.f32 %v1649, 1e-05
  %v1682 = vadd.f32 %v1650, 1e-05
  %v1683 = vadd.f32 %v1651, 1e-05
  %v1684 = vadd.f32 %v1652, 1e-05
  %v1685 = vadd.f32 %v1653, 1e-05
  %v1686 = vadd.f32 %v1654, 1e-05
  %v1687 = vadd.f32 %v1655, 1e-05
  %v1688 = vadd.f32 %v1656, 1e-05
  %v1689 = vadd.f32 %v1657, 1e-05
  %v1690 = vadd.f32 %v1658, 1e-05
  %v1691 = vadd.f32 %v1659, 1e-05
  %v1692 = vadd.f32 %v1660, 1e-05
  %v1693 = vadd.f32 %v1661, 1e-05
  %v1694 = vadd.f32 %v1662, 1e-05
  %v1695 = vadd.f32 %v1663, 1e-05
  %v1696 = vadd.f32 %v1664, 1e-05
  %v1697 = vadd.f32 %v1665, 1e-05
  %v1698 = vadd.f32 %v1666, 1e-05
  %v1699 = vadd.f32 %v1667, 1e-05
  %v1700 = vadd.f32 %v1668, 1e-05
  %v1701 = vadd.f32 %v1669, 1e-05
  %v1702 = vadd.f32 %v1670, 1e-05
  %v1703 = vadd.f32 %v1671, 1e-05
  %v1704 = vadd.f32 %v1672, 1e-05
  %v1705 = vadd.f32 %v1673, 1e-05
  %v1706 = vadd.f32 %v1674, 1e-05
  %v1707 = vrsqrt.pop %v1675
  %v1708 = vrsqrt.pop %v1676
  %v1709 = vrsqrt.pop %v1677
  %v1710 = vrsqrt.pop %v1678
  %v1711 = vrsqrt.pop %v1679
  %v1712 = vrsqrt.pop %v1680
  %v1713 = vrsqrt.pop %v1681
  %v1714 = vrsqrt.pop %v1682
  %v1715 = vrsqrt.pop %v1683
  %v1716 = vrsqrt.pop %v1684
  %v1717 = vrsqrt.pop %v1685
  %v1718 = vrsqrt.pop %v1686
  %v1719 = vrsqrt.pop %v1687
  %v1720 = vrsqrt.pop %v1688
  %v1721 = vrsqrt.pop %v1689
  %v1722 = vrsqrt.pop %v1690
  %v1723 = vrsqrt.pop %v1691
  %v1724 = vrsqrt.pop %v1692
  %v1725 = vrsqrt.pop %v1693
  %v1726 = vrsqrt.pop %v1694
  %v1727 = vrsqrt.pop %v1695
  %v1728 = vrsqrt.pop %v1696
  %v1729 = vrsqrt.pop %v1697
  %v1730 = vrsqrt.pop %v1698
  %v1731 = vrsqrt.pop %v1699
  %v1732 = vrsqrt.pop %v1700
  %v1733 = vrsqrt.pop %v1701
  %v1734 = vrsqrt.pop %v1702
  %v1735 = vrsqrt.pop %v1703
  %v1736 = vrsqrt.pop %v1704
  %v1737 = vrsqrt.pop %v1705
  %v1738 = vrsqrt.pop %v1706
  %v1739 = vmul.f32 %v1515, %v1707
  %v1740 = vmul.f32 %v1516, %v1708
  %v1741 = vmul.f32 %v1517, %v1709
  %v1742 = vmul.f32 %v1518, %v1710
  %v1743 = vmul.f32 %v1519, %v1711
  %v1744 = vmul.f32 %v1520, %v1712
  %v1745 = vmul.f32 %v1521, %v1713
  %v1746 = vmul.f32 %v1522, %v1714
  %v1747 = vmul.f32 %v1523, %v1715
  %v1748 = vmul.f32 %v1524, %v1716
  %v1749 = vmul.f32 %v1525, %v1717
  %v1750 = vmul.f32 %v1526, %v1718
  %v1751 = vmul.f32 %v1527, %v1719
  %v1752 = vmul.f32 %v1528, %v1720
  %v1753 = vmul.f32 %v1529, %v1721
  %v1754 = vmul.f32 %v1530, %v1722
  %v1755 = vmul.f32 %v1531, %v1723
  %v1756 = vmul.f32 %v1532, %v1724
  %v1757 = vmul.f32 %v1533, %v1725
  %v1758 = vmul.f32 %v1534, %v1726
  %v1759 = vmul.f32 %v1535, %v1727
  %v1760 = vmul.f32 %v1536, %v1728
  %v1761 = vmul.f32 %v1537, %v1729
  %v1762 = vmul.f32 %v1538, %v1730
  %v1763 = vmul.f32 %v1539, %v1731
  %v1764 = vmul.f32 %v1540, %v1732
  %v1765 = vmul.f32 %v1541, %v1733
  %v1766 = vmul.f32 %v1542, %v1734
  %v1767 = vmul.f32 %v1543, %v1735
  %v1768 = vmul.f32 %v1544, %v1736
  %v1769 = vmul.f32 %v1545, %v1737
  %v1770 = vmul.f32 %v1546, %v1738
  %v1771 = vlaneseq
  %v1772 = vshrl.u32 %v1771, 7
  %v1773 = vsub.s32 0, %v1772
  %v1774 = vrot.slane %v1385, %v1773
  %v1775 = vmul.f32 %v1739, %v1774
  %v1776 = vmul.f32 %v1740, %v1774
  %v1777 = vmul.f32 %v1741, %v1774
  %v1778 = vmul.f32 %v1742, %v1774
  %v1779 = vmul.f32 %v1743, %v1774
  %v1780 = vmul.f32 %v1744, %v1774
  %v1781 = vmul.f32 %v1745, %v1774
  %v1782 = vmul.f32 %v1746, %v1774
  %v1783 = vmul.f32 %v1747, %v1774
  %v1784 = vmul.f32 %v1748, %v1774
  %v1785 = vmul.f32 %v1749, %v1774
  %v1786 = vmul.f32 %v1750, %v1774
  %v1787 = vmul.f32 %v1751, %v1774
  %v1788 = vmul.f32 %v1752, %v1774
  %v1789 = vmul.f32 %v1753, %v1774
  %v1790 = vmul.f32 %v1754, %v1774
  %v1791 = vmul.f32 %v1755, %v1774
  %v1792 = vmul.f32 %v1756, %v1774
  %v1793 = vmul.f32 %v1757, %v1774
  %v1794 = vmul.f32 %v1758, %v1774
  %v1795 = vmul.f32 %v1759, %v1774
  %v1796 = vmul.f32 %v1760, %v1774
  %v1797 = vmul.f32 %v1761, %v1774
  %v1798 = vmul.f32 %v1762, %v1774
  %v1799 = vmul.f32 %v1763, %v1774
  %v1800 = vmul.f32 %v1764, %v1774
  %v1801 = vmul.f32 %v1765, %v1774
  %v1802 = vmul.f32 %v1766, %v1774
  %v1803 = vmul.f32 %v1767, %v1774
  %v1804 = vmul.f32 %v1768, %v1774
  %v1805 = vmul.f32 %v1769, %v1774
  %v1806 = vmul.f32 %v1770, %v1774
  %v1807 = vlaneseq
  %v1808 = vshrl.u32 %v1807, 7
  %v1809 = vsub.s32 0, %v1808
  %v1810 = vrot.slane %v1386, %v1809
  %v1811 = vadd.f32 %v1775, %v1810
  %v1812 = vadd.f32 %v1776, %v1810
  %v1813 = vadd.f32 %v1777, %v1810
  %v1814 = vadd.f32 %v1778, %v1810
  %v1815 = vadd.f32 %v1779, %v1810
  %v1816 = vadd.f32 %v1780, %v1810
  %v1817 = vadd.f32 %v1781, %v1810
  %v1818 = vadd.f32 %v1782, %v1810
  %v1819 = vadd.f32 %v1783, %v1810
  %v1820 = vadd.f32 %v1784, %v1810
  %v1821 = vadd.f32 %v1785, %v1810
  %v1822 = vadd.f32 %v1786, %v1810
  %v1823 = vadd.f32 %v1787, %v1810
  %v1824 = vadd.f32 %v1788, %v1810
  %v1825 = vadd.f32 %v1789, %v1810
  %v1826 = vadd.f32 %v1790, %v1810
  %v1827 = vadd.f32 %v1791, %v1810
  %v1828 = vadd.f32 %v1792, %v1810
  %v1829 = vadd.f32 %v1793, %v1810
  %v1830 = vadd.f32 %v1794, %v1810
  %v1831 = vadd.f32 %v1795, %v1810
  %v1832 = vadd.f32 %v1796, %v1810
  %v1833 = vadd.f32 %v1797, %v1810
  %v1834 = vadd.f32 %v1798, %v1810
  %v1835 = vadd.f32 %v1799, %v1810
  %v1836 = vadd.f32 %v1800, %v1810
  %v1837 = vadd.f32 %v1801, %v1810
  %v1838 = vadd.f32 %v1802, %v1810
  %v1839 = vadd.f32 %v1803, %v1810
  %v1840 = vadd.f32 %v1804, %v1810
  %v1841 = vadd.f32 %v1805, %v1810
  %v1842 = vadd.f32 %v1806, %v1810
  %v1843 = vmax.f32 %v1811, 0.0
  %v1844 = vmax.f32 %v1812, 0.0
  %v1845 = vmax.f32 %v1813, 0.0
  %v1846 = vmax.f32 %v1814, 0.0
  %v1847 = vmax.f32 %v1815, 0.0
  %v1848 = vmax.f32 %v1816, 0.0
  %v1849 = vmax.f32 %v1817, 0.0
  %v1850 = vmax.f32 %v1818, 0.0
  %v1851 = vmax.f32 %v1819, 0.0
  %v1852 = vmax.f32 %v1820, 0.0
  %v1853 = vmax.f32 %v1821, 0.0
  %v1854 = vmax.f32 %v1822, 0.0
  %v1855 = vmax.f32 %v1823, 0.0
  %v1856 = vmax.f32 %v1824, 0.0
  %v1857 = vmax.f32 %v1825, 0.0
  %v1858 = vmax.f32 %v1826, 0.0
  %v1859 = vmax.f32 %v1827, 0.0
  %v1860 = vmax.f32 %v1828, 0.0
  %v1861 = vmax.f32 %v1829, 0.0
  %v1862 = vmax.f32 %v1830, 0.0
  %v1863 = vmax.f32 %v1831, 0.0
  %v1864 = vmax.f32 %v1832, 0.0
  %v1865 = vmax.f32 %v1833, 0.0
  %v1866 = vmax.f32 %v1834, 0.0
  %v1867 = vmax.f32 %v1835, 0.0
  %v1868 = vmax.f32 %v1836, 0.0
  %v1869 = vmax.f32 %v1837, 0.0
  %v1870 = vmax.f32 %v1838, 0.0
  %v1871 = vmax.f32 %v1839, 0.0
  %v1872 = vmax.f32 %v1840, 0.0
  %v1873 = vmax.f32 %v1841, 0.0
  %v1874 = vmax.f32 %v1842, 0.0
  %s1875 = scalar_lea.vmem %s3, 128
  %v1876 = vld [vmem:[%s1875] sm:$0xff]
  %v1877 = vld [vmem:[%s1875 + $0x8] sm:$0xff]
  %v1878 = vld [vmem:[%s1875 + $0x10] sm:$0xff]
  %v1879 = vld [vmem:[%s1875 + $0x18] sm:$0xff]
  %v1880 = vld [vmem:[%s1875 + $0x20] sm:$0xff]
  %v1881 = vld [vmem:[%s1875 + $0x28] sm:$0xff]
  %v1882 = vld [vmem:[%s1875 + $0x30] sm:$0xff]
  %v1883 = vld [vmem:[%s1875 + $0x38] sm:$0xff]
  %v1884 = vld [vmem:[%s1875 + $0x40] sm:$0xff]
  %v1885 = vld [vmem:[%s1875 + $0x48] sm:$0xff]
  %v1886 = vld [vmem:[%s1875 + $0x50] sm:$0xff]
  %v1887 = vld [vmem:[%s1875 + $0x58] sm:$0xff]
  %v1888 = vld [vmem:[%s1875 + $0x60] sm:$0xff]
  %v1889 = vld [vmem:[%s1875 + $0x68] sm:$0xff]
  %v1890 = vld [vmem:[%s1875 + $0x70] sm:$0xff]
  %v1891 = vld [vmem:[%s1875 + $0x78] sm:$0xff]
  %v1892 = vld [vmem:[%s4 + $0x7] sm:$0x1]
  %v1893 = vlaneseq
  %v1894 = vshrl.u32 %v1893, 7
  %v1895 = vsub.s32 0, %v1894
  %v1896 = vrot.slane %v1892, %v1895
  %1897 = vmatprep.subr.mxu0 0.0
  %1898 = vmatpush1.msra.mxu0 %v1891
  %1899 = vmatprep.subr.mxu0 0.0
  %1900 = vmatpush1.msra.mxu0 %v1890
  %1901 = vmatprep.subr.mxu0 0.0
  %1902 = vmatpush1.msra.mxu0 %v1889
  %1903 = vmatprep.subr.mxu0 0.0
  %1904 = vmatpush1.msra.mxu0 %v1888
  %1905 = vmatprep.subr.mxu0 0.0
  %1906 = vmatpush1.msra.mxu0 %v1887
  %1907 = vmatprep.subr.mxu0 0.0
  %1908 = vmatpush1.msra.mxu0 %v1886
  %1909 = vmatprep.subr.mxu0 0.0
  %1910 = vmatpush1.msra.mxu0 %v1885
  %1911 = vmatprep.subr.mxu0 0.0
  %1912 = vmatpush1.msra.mxu0 %v1884
  %1913 = vmatprep.subr.mxu0 0.0
  %1914 = vmatpush1.msra.mxu0 %v1883
  %1915 = vmatprep.subr.mxu0 0.0
  %1916 = vmatpush1.msra.mxu0 %v1882
  %1917 = vmatprep.subr.mxu0 0.0
  %1918 = vmatpush1.msra.mxu0 %v1881
  %1919 = vmatprep.subr.mxu0 0.0
  %1920 = vmatpush1.msra.mxu0 %v1880
  %1921 = vmatprep.subr.mxu0 0.0
  %1922 = vmatpush1.msra.mxu0 %v1879
  %1923 = vmatprep.subr.mxu0 0.0
  %1924 = vmatpush1.msra.mxu0 %v1878
  %1925 = vmatprep.subr.mxu0 0.0
  %1926 = vmatpush1.msra.mxu0 %v1877
  %1927 = vmatprep.subr.mxu0 0.0
  %1928 = vmatpush1.msra.mxu0 %v1876
  %1929 = vmatprep.subr.mxu0 0.0
  %1930 = vmatpush2.msra.mxu0 0.0
  %1931 = vmatprep.subr.mxu0 0.0
  %1932 = vmatpush2.msra.mxu0 0.0
  %1933 = vmatprep.subr.mxu0 0.0
  %1934 = vmatpush2.msra.mxu0 0.0
  %1935 = vmatprep.subr.mxu0 0.0
  %1936 = vmatpush2.msra.mxu0 0.0
  %1937 = vmatprep.subr.mxu0 0.0
  %1938 = vmatpush2.msra.mxu0 0.0
  %1939 = vmatprep.subr.mxu0 0.0
  %1940 = vmatpush2.msra.mxu0 0.0
  %1941 = vmatprep.subr.mxu0 0.0
  %1942 = vmatpush2.msra.mxu0 0.0
  %1943 = vmatprep.subr.mxu0 0.0
  %1944 = vmatpush2.msra.mxu0 0.0
  %1945 = vmatprep.subr.mxu0 0.0
  %1946 = vmatpush2.msra.mxu0 0.0
  %1947 = vmatprep.subr.mxu0 0.0
  %1948 = vmatpush2.msra.mxu0 0.0
  %1949 = vmatprep.subr.mxu0 0.0
  %1950 = vmatpush2.msra.mxu0 0.0
  %1951 = vmatprep.subr.mxu0 0.0
  %1952 = vmatpush2.msra.mxu0 0.0
  %1953 = vmatprep.subr.mxu0 0.0
  %1954 = vmatpush2.msra.mxu0 0.0
  %1955 = vmatprep.subr.mxu0 0.0
  %1956 = vmatpush2.msra.mxu0 0.0
  %1957 = vmatprep.subr.mxu0 0.0
  %1958 = vmatpush2.msra.mxu0 0.0
  %1959 = vmatprep.subr.mxu0 0.0
  %1960 = vmatpush2.msra.mxu0 0.0
  %1961 = vmatprep.mubr.f32.mxu0 0.0
  %1962 = vmatmul.mubr.f32.gmra.mxu0 %v1843
  %v1963 = vpop.f32.mrf.mxu0
  %v1964 = vadd.f32 %v1896, %v1963
  %v1965 = vpop.f32.mrf.mxu0
  %1966 = vmatprep.mubr.f32.mxu0 0.0
  %1967 = vmatmul.mubr.f32.gmra.mxu0 %v1844
  %v1968 = vpop.f32.mrf.mxu0
  %v1969 = vadd.f32 %v1896, %v1968
  %v1970 = vpop.f32.mrf.mxu0
  %1971 = vmatprep.mubr.f32.mxu0 0.0
  %1972 = vmatmul.mubr.f32.gmra.mxu0 %v1845
  %v1973 = vpop.f32.mrf.mxu0
  %v1974 = vadd.f32 %v1896, %v1973
  %v1975 = vpop.f32.mrf.mxu0
  %1976 = vmatprep.mubr.f32.mxu0 0.0
  %1977 = vmatmul.mubr.f32.gmra.mxu0 %v1846
  %v1978 = vpop.f32.mrf.mxu0
  %v1979 = vadd.f32 %v1896, %v1978
  %v1980 = vpop.f32.mrf.mxu0
  %1981 = vmatprep.mubr.f32.mxu0 0.0
  %1982 = vmatmul.mubr.f32.gmra.mxu0 %v1847
  %v1983 = vpop.f32.mrf.mxu0
  %v1984 = vadd.f32 %v1896, %v1983
  %v1985 = vpop.f32.mrf.mxu0
  %1986 = vmatprep.mubr.f32.mxu0 0.0
  %1987 = vmatmul.mubr.f32.gmra.mxu0 %v1848
  %v1988 = vpop.f32.mrf.mxu0
  %v1989 = vadd.f32 %v1896, %v1988
  %v1990 = vpop.f32.mrf.mxu0
  %1991 = vmatprep.mubr.f32.mxu0 0.0
  %1992 = vmatmul.mubr.f32.gmra.mxu0 %v1849
  %v1993 = vpop.f32.mrf.mxu0
  %v1994 = vadd.f32 %v1896, %v1993
  %v1995 = vpop.f32.mrf.mxu0
  %1996 = vmatprep.mubr.f32.mxu0 0.0
  %1997 = vmatmul.mubr.f32.gmra.mxu0 %v1850
  %v1998 = vpop.f32.mrf.mxu0
  %v1999 = vadd.f32 %v1896, %v1998
  %v2000 = vpop.f32.mrf.mxu0
  %2001 = vmatprep.mubr.f32.mxu0 0.0
  %2002 = vmatmul.mubr.f32.gmra.mxu0 %v1851
  %v2003 = vpop.f32.mrf.mxu0
  %v2004 = vadd.f32 %v1896, %v2003
  %v2005 = vpop.f32.mrf.mxu0
  %2006 = vmatprep.mubr.f32.mxu0 0.0
  %2007 = vmatmul.mubr.f32.gmra.mxu0 %v1852
  %v2008 = vpop.f32.mrf.mxu0
  %v2009 = vadd.f32 %v1896, %v2008
  %v2010 = vpop.f32.mrf.mxu0
  %2011 = vmatprep.mubr.f32.mxu0 0.0
  %2012 = vmatmul.mubr.f32.gmra.mxu0 %v1853
  %v2013 = vpop.f32.mrf.mxu0
  %v2014 = vadd.f32 %v1896, %v2013
  %v2015 = vpop.f32.mrf.mxu0
  %2016 = vmatprep.mubr.f32.mxu0 0.0
  %2017 = vmatmul.mubr.f32.gmra.mxu0 %v1854
  %v2018 = vpop.f32.mrf.mxu0
  %v2019 = vadd.f32 %v1896, %v2018
  %v2020 = vpop.f32.mrf.mxu0
  %2021 = vmatprep.mubr.f32.mxu0 0.0
  %2022 = vmatmul.mubr.f32.gmra.mxu0 %v1855
  %v2023 = vpop.f32.mrf.mxu0
  %v2024 = vadd.f32 %v1896, %v2023
  %v2025 = vpop.f32.mrf.mxu0
  %2026 = vmatprep.mubr.f32.mxu0 0.0
  %2027 = vmatmul.mubr.f32.gmra.mxu0 %v1856
  %v2028 = vpop.f32.mrf.mxu0
  %v2029 = vadd.f32 %v1896, %v2028
  %v2030 = vpop.f32.mrf.mxu0
  %2031 = vmatprep.mubr.f32.mxu0 0.0
  %2032 = vmatmul.mubr.f32.gmra.mxu0 %v1857
  %v2033 = vpop.f32.mrf.mxu0
  %v2034 = vadd.f32 %v1896, %v2033
  %v2035 = vpop.f32.mrf.mxu0
  %2036 = vmatprep.mubr.f32.mxu0 0.0
  %2037 = vmatmul.mubr.f32.gmra.mxu0 %v1858
  %v2038 = vpop.f32.mrf.mxu0
  %v2039 = vadd.f32 %v1896, %v2038
  %v2040 = vpop.f32.mrf.mxu0
  %2041 = vmatprep.mubr.f32.mxu0 0.0
  %2042 = vmatmul.mubr.f32.gmra.mxu0 %v1859
  %v2043 = vpop.f32.mrf.mxu0
  %v2044 = vadd.f32 %v1896, %v2043
  %v2045 = vpop.f32.mrf.mxu0
  %2046 = vmatprep.mubr.f32.mxu0 0.0
  %2047 = vmatmul.mubr.f32.gmra.mxu0 %v1860
  %v2048 = vpop.f32.mrf.mxu0
  %v2049 = vadd.f32 %v1896, %v2048
  %v2050 = vpop.f32.mrf.mxu0
  %2051 = vmatprep.mubr.f32.mxu0 0.0
  %2052 = vmatmul.mubr.f32.gmra.mxu0 %v1861
  %v2053 = vpop.f32.mrf.mxu0
  %v2054 = vadd.f32 %v1896, %v2053
  %v2055 = vpop.f32.mrf.mxu0
  %2056 = vmatprep.mubr.f32.mxu0 0.0
  %2057 = vmatmul.mubr.f32.gmra.mxu0 %v1862
  %v2058 = vpop.f32.mrf.mxu0
  %v2059 = vadd.f32 %v1896, %v2058
  %v2060 = vpop.f32.mrf.mxu0
  %2061 = vmatprep.mubr.f32.mxu0 0.0
  %2062 = vmatmul.mubr.f32.gmra.mxu0 %v1863
  %v2063 = vpop.f32.mrf.mxu0
  %v2064 = vadd.f32 %v1896, %v2063
  %v2065 = vpop.f32.mrf.mxu0
  %2066 = vmatprep.mubr.f32.mxu0 0.0
  %2067 = vmatmul.mubr.f32.gmra.mxu0 %v1864
  %v2068 = vpop.f32.mrf.mxu0
  %v2069 = vadd.f32 %v1896, %v2068
  %v2070 = vpop.f32.mrf.mxu0
  %2071 = vmatprep.mubr.f32.mxu0 0.0
  %2072 = vmatmul.mubr.f32.gmra.mxu0 %v1865
  %v2073 = vpop.f32.mrf.mxu0
  %v2074 = vadd.f32 %v1896, %v2073
  %v2075 = vpop.f32.mrf.mxu0
  %2076 = vmatprep.mubr.f32.mxu0 0.0
  %2077 = vmatmul.mubr.f32.gmra.mxu0 %v1866
  %v2078 = vpop.f32.mrf.mxu0
  %v2079 = vadd.f32 %v1896, %v2078
  %v2080 = vpop.f32.mrf.mxu0
  %2081 = vmatprep.mubr.f32.mxu0 0.0
  %2082 = vmatmul.mubr.f32.gmra.mxu0 %v1867
  %v2083 = vpop.f32.mrf.mxu0
  %v2084 = vadd.f32 %v1896, %v2083
  %v2085 = vpop.f32.mrf.mxu0
  %2086 = vmatprep.mubr.f32.mxu0 0.0
  %2087 = vmatmul.mubr.f32.gmra.mxu0 %v1868
  %v2088 = vpop.f32.mrf.mxu0
  %v2089 = vadd.f32 %v1896, %v2088
  %v2090 = vpop.f32.mrf.mxu0
  %2091 = vmatprep.mubr.f32.mxu0 0.0
  %2092 = vmatmul.mubr.f32.gmra.mxu0 %v1869
  %v2093 = vpop.f32.mrf.mxu0
  %v2094 = vadd.f32 %v1896, %v2093
  %v2095 = vpop.f32.mrf.mxu0
  %2096 = vmatprep.mubr.f32.mxu0 0.0
  %2097 = vmatmul.mubr.f32.gmra.mxu0 %v1870
  %v2098 = vpop.f32.mrf.mxu0
  %v2099 = vadd.f32 %v1896, %v2098
  %v2100 = vpop.f32.mrf.mxu0
  %2101 = vmatprep.mubr.f32.mxu0 0.0
  %2102 = vmatmul.mubr.f32.gmra.mxu0 %v1871
  %v2103 = vpop.f32.mrf.mxu0
  %v2104 = vadd.f32 %v1896, %v2103
  %v2105 = vpop.f32.mrf.mxu0
  %2106 = vmatprep.mubr.f32.mxu0 0.0
  %2107 = vmatmul.mubr.f32.gmra.mxu0 %v1872
  %v2108 = vpop.f32.mrf.mxu0
  %v2109 = vadd.f32 %v1896, %v2108
  %v2110 = vpop.f32.mrf.mxu0
  %2111 = vmatprep.mubr.f32.mxu0 0.0
  %2112 = vmatmul.mubr.f32.gmra.mxu0 %v1873
  %v2113 = vpop.f32.mrf.mxu0
  %v2114 = vadd.f32 %v1896, %v2113
  %v2115 = vpop.f32.mrf.mxu0
  %2116 = vmatprep.mubr.f32.mxu0 0.0
  %2117 = vmatmul.mubr.f32.gmra.mxu0 %v1874
  %v2118 = vpop.f32.mrf.mxu0
  %v2119 = vadd.f32 %v1896, %v2118
  %v2120 = vpop.f32.mrf.mxu0
  %2121 = vdwg.mxu0
  %2122 = vst [vmem:[%s5] sm:$0xff] %v1964
  %2123 = vst [vmem:[%s5 + $0x8] sm:$0xff] %v1969
  %2124 = vst [vmem:[%s5 + $0x10] sm:$0xff] %v1974
  %2125 = vst [vmem:[%s5 + $0x18] sm:$0xff] %v1979
  %2126 = vst [vmem:[%s5 + $0x20] sm:$0xff] %v1984
  %2127 = vst [vmem:[%s5 + $0x28] sm:$0xff] %v1989
  %2128 = vst [vmem:[%s5 + $0x30] sm:$0xff] %v1994
  %2129 = vst [vmem:[%s5 + $0x38] sm:$0xff] %v1999
  %2130 = vst [vmem:[%s5 + $0x40] sm:$0xff] %v2004
  %2131 = vst [vmem:[%s5 + $0x48] sm:$0xff] %v2009
  %2132 = vst [vmem:[%s5 + $0x50] sm:$0xff] %v2014
  %2133 = vst [vmem:[%s5 + $0x58] sm:$0xff] %v2019
  %2134 = vst [vmem:[%s5 + $0x60] sm:$0xff] %v2024
  %2135 = vst [vmem:[%s5 + $0x68] sm:$0xff] %v2029
  %2136 = vst [vmem:[%s5 + $0x70] sm:$0xff] %v2034
  %2137 = vst [vmem:[%s5 + $0x78] sm:$0xff] %v2039
  %2138 = vst [vmem:[%s5 + $0x80] sm:$0xff] %v2044
  %2139 = vst [vmem:[%s5 + $0x88] sm:$0xff] %v2049
  %2140 = vst [vmem:[%s5 + $0x90] sm:$0xff] %v2054
  %2141 = vst [vmem:[%s5 + $0x98] sm:$0xff] %v2059
  %2142 = vst [vmem:[%s5 + $0xa0] sm:$0xff] %v2064
  %2143 = vst [vmem:[%s5 + $0xa8] sm:$0xff] %v2069
  %2144 = vst [vmem:[%s5 + $0xb0] sm:$0xff] %v2074
  %2145 = vst [vmem:[%s5 + $0xb8] sm:$0xff] %v2079
  %2146 = vst [vmem:[%s5 + $0xc0] sm:$0xff] %v2084
  %2147 = vst [vmem:[%s5 + $0xc8] sm:$0xff] %v2089
  %2148 = vst [vmem:[%s5 + $0xd0] sm:$0xff] %v2094
  %2149 = vst [vmem:[%s5 + $0xd8] sm:$0xff] %v2099
  %2150 = vst [vmem:[%s5 + $0xe0] sm:$0xff] %v2104
  %2151 = vst [vmem:[%s5 + $0xe8] sm:$0xff] %v2109
  %2152 = vst [vmem:[%s5 + $0xf0] sm:$0xff] %v2114
  %2153 = vst [vmem:[%s5 + $0xf8] sm:$0xff] %v2119
  // Predicated region
  $region22: #{_lambda_.1} parent=0 // pred_check
    _
  $region23: #{_lambda_.1} parent=0 // pred_check_branch
    %2155 = sbr.rel (0) target = $region25
  $region24: #{_lambda_.1} parent=0 // pred_region
    _
  $region25: #{_lambda_.1} parent=0 // pred_fallthru
    _
  // Predicated region
  $region26: #{_lambda_.1} parent=0 // pred_check
    _
  $region27: #{_lambda_.1} parent=0 // pred_check_branch
    %2157 = sbr.rel (0) target = $region29
  $region28: #{_lambda_.1} parent=0 // pred_region
    _
  $region29: #{_lambda_.1} parent=0 // pred_fallthru
    _

</llo_original>
